<compile_context>
chip_gen: v7x
topology: tpu7x:2x2x1
jax: 0.10.0
libtpu: 0.0.40
codegen_flags: <defaults>
</compile_context>

<pallas_src>
import functools

import jax
import jax.numpy as jnp
from jax.experimental import pallas as pl
from jax.experimental.pallas import tpu as pltpu


_K0 = 0.7978845608028654   # sqrt(2/pi)
_K1 = 0.044715


def _gelu_tanh(x):
    # tanh-approx GELU (PyTorch nn.GELU(approximate='tanh')); |err| <~ 1e-3 vs
    # the exact erf formulation.  tanh lowers to the EUP slot (nearly free).
    return 0.5 * x * (1.0 + jnp.tanh(_K0 * (x + _K1 * x * x * x)))


def _convglu_kernel(x_ref, w1_ref, b1_ref, wd_ref, bd_ref, w2_ref, b2_ref,
                    o_ref, yp_ref, *, shortcut):
    # x_ref : (1, H, W, C)   input image tile (NHWC, f32)
    # w1_ref: (C, C) bf16    fc1 weight (un-split; chunk(2) -> lane slice)
    # b1_ref: (1, C) f32
    # wd_ref: (9, Ch) f32    depthwise 3x3 taps, dy-major / dx-minor
    # bd_ref: (1, Ch) f32
    # w2_ref: (Ch, C) bf16,  b2_ref: (1, C) f32
    # o_ref : (1, H, W, C)
    # yp_ref: VMEM scratch (H+2, W+2, Ch) f32 -- zero-halo buffer for dwconv
    _, H, W, C = o_ref.shape
    Ch = w2_ref.shape[0]

    # ---- fc1: one lane-dense bf16 MXU matmul, f32 accumulation --------------
    x2d = x_ref[0].reshape(H * W, C)                       # layout-free (W%8==0)
    yv = jnp.dot(x2d.astype(jnp.bfloat16), w1_ref[...],
                 preferred_element_type=jnp.float32) + b1_ref[...]
    y = yv[:, :Ch]                                         # gate half (lane-aligned)

    # ---- depthwise 3x3, stride 1, pad 1, bias (pure VPU, f32) ----------------
    # Zero only the halo ring each step; the interior is fully overwritten.
    yp_ref[0:1, :, :] = jnp.zeros((1, W + 2, Ch), jnp.float32)
    yp_ref[H + 1:H + 2, :, :] = jnp.zeros((1, W + 2, Ch), jnp.float32)
    yp_ref[:, 0:1, :] = jnp.zeros((H + 2, 1, Ch), jnp.float32)
    yp_ref[:, W + 1:W + 2, :] = jnp.zeros((H + 2, 1, Ch), jnp.float32)
    yp_ref[1:H + 1, 1:W + 1, :] = y.reshape(H, W, Ch)

    wd = wd_ref[...]                                       # (9, Ch)
    acc = jnp.zeros((H, W, Ch), jnp.float32)
    for t in range(9):                                     # static, fully unrolled
        dy, dx = divmod(t, 3)
        acc = acc + yp_ref[dy:dy + H, dx:dx + W, :] * wd[t]
    acc = acc + bd_ref[...]

    # ---- GELU gating (value half read only now) + fc2 ------------------------
    v = yv[:, Ch:]
    g = (_gelu_tanh(acc).reshape(H * W, Ch) * v).astype(jnp.bfloat16)
    out = jnp.dot(g, w2_ref[...], preferred_element_type=jnp.float32) + b2_ref[...]
    out = out.reshape(1, H, W, C)
    if shortcut:                                           # residual fused in-kernel
        out = out + x_ref[...]
    o_ref[...] = out.astype(o_ref.dtype)


def conv_glu(params, x, *, shortcut=False):
    """ConvGLU forward. x: (N, H, W, C) NHWC f32 with C = n_features (even)."""
    N, H, W, C = x.shape
    assert C % 2 == 0
    assert W % 8 == 0, "layout-free (H,W,C)->(H*W,C) reshape needs W % 8 == 0"
    Ch = C // 2
    p = params

    kernel = functools.partial(_convglu_kernel, shortcut=shortcut)
    full = lambda n: (0, 0)     # constant block index -> parameters DMA'd once
    return pl.pallas_call(
        kernel,
        out_shape=jax.ShapeDtypeStruct((N, H, W, C), x.dtype),
        grid=(N,),
        in_specs=[
            pl.BlockSpec((1, H, W, C), lambda n: (n, 0, 0, 0)),
            pl.BlockSpec((C, C), full),      # fc1 weight (bf16, merged halves)
            pl.BlockSpec((1, C), full),      # fc1 bias
            pl.BlockSpec((9, Ch), full),     # depthwise taps
            pl.BlockSpec((1, Ch), full),     # depthwise bias
            pl.BlockSpec((Ch, C), full),     # fc2 weight (bf16)
            pl.BlockSpec((1, C), full),      # fc2 bias
        ],
        out_specs=pl.BlockSpec((1, H, W, C), lambda n: (n, 0, 0, 0)),
        scratch_shapes=[pltpu.VMEM((H + 2, W + 2, Ch), jnp.float32)],
        compiler_params=pltpu.CompilerParams(
            dimension_semantics=("parallel",)),
    )(x, p["w1"], p["b1"].reshape(1, C),
      p["wd"].reshape(9, Ch), p["bd"].reshape(1, Ch),
      p["w2"], p["b2"].reshape(1, C))


# ----------------------------------------------------------------------------
# Deterministic synthetic parameters (no checkpoint).  fc1/fc2 weights are kept
# in bf16 (the dtype the kernel feeds to the MXU); everything else is f32.
# ----------------------------------------------------------------------------
def init_params(key, n_features):
    C = n_features
    Ch = C // 2
    ks = jax.random.split(key, 6)
    w1 = (jax.random.normal(ks[0], (C, C), jnp.float32) / jnp.sqrt(C)
          ).astype(jnp.bfloat16)                                      # (Cin, Cout)
    b1 = 0.1 * jax.random.normal(ks[1], (C,), jnp.float32)
    wd = jax.random.normal(ks[2], (3, 3, Ch), jnp.float32) / 3.0       # depthwise taps
    bd = 0.1 * jax.random.normal(ks[3], (Ch,), jnp.float32)
    w2 = (jax.random.normal(ks[4], (Ch, C), jnp.float32) / jnp.sqrt(Ch)
          ).astype(jnp.bfloat16)                                      # (Cin, Cout)
    b2 = 0.1 * jax.random.normal(ks[5], (C,), jnp.float32)
    return {"w1": w1, "b1": b1, "wd": wd, "bd": bd, "w2": w2, "b2": b2}


# Pure-JAX reference matching the kernel's numerics (bf16 MXU operands,
# tanh-approx GELU) — for a tight correctness check.
def conv_glu_ref_matched(params, x):
    p = params
    N, H, W, C = x.shape
    Ch = C // 2
    x2 = x.reshape(-1, C).astype(jnp.bfloat16)
    yv = jnp.dot(x2, p["w1"], preferred_element_type=jnp.float32) + p["b1"]
    y = yv[:, :Ch].reshape(N, H, W, Ch)
    v = yv[:, Ch:]
    yp = jnp.pad(y, ((0, 0), (1, 1), (1, 1), (0, 0)))
    acc = jnp.zeros_like(y)
    for dy in range(3):
        for dx in range(3):
            acc = acc + yp[:, dy:dy + H, dx:dx + W, :] * p["wd"][dy, dx]
    acc = acc + p["bd"]
    g = (_gelu_tanh(acc).reshape(-1, Ch) * v).astype(jnp.bfloat16)
    out = jnp.dot(g, p["w2"], preferred_element_type=jnp.float32) + p["b2"]
    return out.reshape(N, H, W, C)


# Pure-JAX reference mirroring torch exactly (f32 matmuls, exact erf GELU) —
# looser sanity check of the bf16 / tanh approximations.
def conv_glu_ref_exact(params, x):
    p = params
    N, H, W, C = x.shape
    Ch = C // 2
    w1 = p["w1"].astype(jnp.float32)
    w2 = p["w2"].astype(jnp.float32)
    x2 = x.reshape(-1, C)
    yv = x2 @ w1 + p["b1"]
    y = yv[:, :Ch].reshape(N, H, W, Ch)
    v = yv[:, Ch:]
    yp = jnp.pad(y, ((0, 0), (1, 1), (1, 1), (0, 0)))
    acc = jnp.zeros_like(y)
    for dy in range(3):
        for dx in range(3):
            acc = acc + yp[:, dy:dy + H, dx:dx + W, :] * p["wd"][dy, dx]
    acc = acc + p["bd"]
    g = jax.nn.gelu(acc, approximate=False).reshape(-1, Ch) * v
    out = g @ w2 + p["b2"]
    return out.reshape(N, H, W, C)


if __name__ == "__main__":
    key = jax.random.PRNGKey(0)
    kp, kx = jax.random.split(key)

    n_features = 256          # module default -> lane-dense channels (>=128)
    N, H, W = 2, 16, 16

    params = init_params(kp, n_features)
    x = jax.random.normal(kx, (N, H, W, n_features), jnp.float32)   # NHWC

    fwd = jax.jit(functools.partial(conv_glu, params))
    out = fwd(x)
    jax.block_until_ready(out)

    assert out.shape == (N, H, W, n_features), out.shape
    assert bool(jnp.isfinite(out).all())

    ref_m = conv_glu_ref_matched(params, x)
    assert jnp.allclose(out, ref_m, atol=1e-2, rtol=1e-2), \
        float(jnp.max(jnp.abs(out - ref_m)))

    ref_e = conv_glu_ref_exact(params, x)
    assert jnp.allclose(out, ref_e, atol=1e-1, rtol=1e-1), \
        float(jnp.max(jnp.abs(out - ref_e)))

    print("KERNEL_OK")
</pallas_src>

<mosaic_0001>
module attributes {stable_mosaic.version = 11 : i64} {
  func.func @_convglu_kernel(%arg0: i32, %arg1: memref<1x16x16x256xf32, #tpu.memory_space<vmem>>, %arg2: memref<256x256xbf16, #tpu.memory_space<vmem>>, %arg3: memref<1x256xf32, #tpu.memory_space<vmem>>, %arg4: memref<9x128xf32, #tpu.memory_space<vmem>>, %arg5: memref<1x128xf32, #tpu.memory_space<vmem>>, %arg6: memref<128x256xbf16, #tpu.memory_space<vmem>>, %arg7: memref<1x256xf32, #tpu.memory_space<vmem>>, %arg8: memref<1x16x16x256xf32, #tpu.memory_space<vmem>>, %arg9: memref<18x18x128xf32, #tpu.memory_space<vmem>>) attributes {dimension_semantics = [#tpu.dimension_semantics<parallel>], iteration_bounds = array<i64: 2>, scalar_prefetch = 0 : i64, scratch_operands = 1 : i64, tpu.core_type = #tpu.core_type<tc>, window_params = [{transform_indices = @transform_0, window_bounds = array<i64: 1, 16, 16, 256>}, {pipeline_mode = #tpu.pipeline_mode<synchronous>, transform_indices = @transform_1, window_bounds = array<i64: 256, 256>}, {pipeline_mode = #tpu.pipeline_mode<synchronous>, transform_indices = @transform_2, window_bounds = array<i64: 1, 256>}, {pipeline_mode = #tpu.pipeline_mode<synchronous>, transform_indices = @transform_3, window_bounds = array<i64: 9, 128>}, {pipeline_mode = #tpu.pipeline_mode<synchronous>, transform_indices = @transform_4, window_bounds = array<i64: 1, 128>}, {pipeline_mode = #tpu.pipeline_mode<synchronous>, transform_indices = @transform_5, window_bounds = array<i64: 128, 256>}, {pipeline_mode = #tpu.pipeline_mode<synchronous>, transform_indices = @transform_6, window_bounds = array<i64: 1, 256>}, {transform_indices = @transform_7, window_bounds = array<i64: 1, 16, 16, 256>}]} {
    %c0 = arith.constant 0 : index
    %c0_0 = arith.constant 0 : index
    %c0_1 = arith.constant 0 : index
    %c0_2 = arith.constant 0 : index
    %0 = vector.load %arg1[%c0, %c0_0, %c0_1, %c0_2] : memref<1x16x16x256xf32, #tpu.memory_space<vmem>>, vector<1x16x16x256xf32>
    %1 = vector.shape_cast %0 : vector<1x16x16x256xf32> to vector<16x16x256xf32>
    %2 = vector.shape_cast %1 : vector<16x16x256xf32> to vector<256x256xf32>
    %3 = arith.truncf %2 : vector<256x256xf32> to vector<256x256xbf16>
    %c0_3 = arith.constant 0 : index
    %c0_4 = arith.constant 0 : index
    %4 = vector.load %arg2[%c0_3, %c0_4] : memref<256x256xbf16, #tpu.memory_space<vmem>>, vector<256x256xbf16>
    %cst = arith.constant dense<0.000000e+00> : vector<256x256xf32>
    %5 = tpu.matmul %3, %4, %cst {dimension_numbers = #tpu.dot_dimension_numbers<[1], [0], [0], [1], [0, 0, 1, 1], [], []>} : vector<256x256xbf16>, vector<256x256xbf16>, vector<256x256xf32> -> vector<256x256xf32>
    %c0_5 = arith.constant 0 : index
    %c0_6 = arith.constant 0 : index
    %6 = vector.load %arg3[%c0_5, %c0_6] : memref<1x256xf32, #tpu.memory_space<vmem>>, vector<1x256xf32>
    %7 = vector.broadcast %6 : vector<1x256xf32> to vector<256x256xf32>
    %8 = arith.addf %5, %7 : vector<256x256xf32>
    %9 = vector.extract_strided_slice %8 {offsets = [0, 0], sizes = [256, 128], strides = [1, 1]} : vector<256x256xf32> to vector<256x128xf32>
    %cst_7 = arith.constant 0.000000e+00 : f32
    %10 = vector.broadcast %cst_7 : f32 to vector<1x18x128xf32>
    %c0_8 = arith.constant 0 : index
    %c0_9 = arith.constant 0 : index
    %c0_10 = arith.constant 0 : index
    %11 = vector.load %arg9[%c0_8, %c0_9, %c0_10] : memref<18x18x128xf32, #tpu.memory_space<vmem>>, vector<1x18x128xf32>
    tpu.vector_store %arg9[%c0_8, %c0_9, %c0_10], %10 {strides = array<i32>} : memref<18x18x128xf32, #tpu.memory_space<vmem>>, vector<1x18x128xf32>,
    %cst_11 = arith.constant 0.000000e+00 : f32
    %12 = vector.broadcast %cst_11 : f32 to vector<1x18x128xf32>
    %c17 = arith.constant 17 : index
    %c0_12 = arith.constant 0 : index
    %c0_13 = arith.constant 0 : index
    %13 = vector.load %arg9[%c17, %c0_12, %c0_13] : memref<18x18x128xf32, #tpu.memory_space<vmem>>, vector<1x18x128xf32>
    tpu.vector_store %arg9[%c17, %c0_12, %c0_13], %12 {strides = array<i32>} : memref<18x18x128xf32, #tpu.memory_space<vmem>>, vector<1x18x128xf32>,
    %cst_14 = arith.constant 0.000000e+00 : f32
    %14 = vector.broadcast %cst_14 : f32 to vector<18x1x128xf32>
    %c0_15 = arith.constant 0 : index
    %c0_16 = arith.constant 0 : index
    %c0_17 = arith.constant 0 : index
    %15 = vector.load %arg9[%c0_15, %c0_16, %c0_17] : memref<18x18x128xf32, #tpu.memory_space<vmem>>, vector<18x1x128xf32>
    tpu.vector_store %arg9[%c0_15, %c0_16, %c0_17], %14 {strides = array<i32>} : memref<18x18x128xf32, #tpu.memory_space<vmem>>, vector<18x1x128xf32>,
    %cst_18 = arith.constant 0.000000e+00 : f32
    %16 = vector.broadcast %cst_18 : f32 to vector<18x1x128xf32>
    %c0_19 = arith.constant 0 : index
    %c17_20 = arith.constant 17 : index
    %c0_21 = arith.constant 0 : index
    %17 = vector.load %arg9[%c0_19, %c17_20, %c0_21] : memref<18x18x128xf32, #tpu.memory_space<vmem>>, vector<18x1x128xf32>
    tpu.vector_store %arg9[%c0_19, %c17_20, %c0_21], %16 {strides = array<i32>} : memref<18x18x128xf32, #tpu.memory_space<vmem>>, vector<18x1x128xf32>,
    %18 = vector.shape_cast %9 : vector<256x128xf32> to vector<16x16x128xf32>
    %c1 = arith.constant 1 : index
    %c1_22 = arith.constant 1 : index
    %c0_23 = arith.constant 0 : index
    %19 = vector.load %arg9[%c1, %c1_22, %c0_23] : memref<18x18x128xf32, #tpu.memory_space<vmem>>, vector<16x16x128xf32>
    tpu.vector_store %arg9[%c1, %c1_22, %c0_23], %18 {strides = array<i32>} : memref<18x18x128xf32, #tpu.memory_space<vmem>>, vector<16x16x128xf32>,
    %c0_24 = arith.constant 0 : index
    %c0_25 = arith.constant 0 : index
    %20 = vector.load %arg4[%c0_24, %c0_25] : memref<9x128xf32, #tpu.memory_space<vmem>>, vector<9x128xf32>
    %cst_26 = arith.constant 0.000000e+00 : f32
    %21 = vector.broadcast %cst_26 : f32 to vector<16x16x128xf32>
    %c0_27 = arith.constant 0 : index
    %c0_28 = arith.constant 0 : index
    %c0_29 = arith.constant 0 : index
    %22 = vector.load %arg9[%c0_27, %c0_28, %c0_29] : memref<18x18x128xf32, #tpu.memory_space<vmem>>, vector<16x16x128xf32>
    %23 = vector.extract_strided_slice %20 {offsets = [0, 0], sizes = [1, 128], strides = [1, 1]} : vector<9x128xf32> to vector<1x128xf32>
    %24 = vector.shape_cast %23 : vector<1x128xf32> to vector<128xf32>
    %25 = vector.shape_cast %24 : vector<128xf32> to vector<1x1x128xf32>
    %26 = vector.broadcast %25 : vector<1x1x128xf32> to vector<16x16x128xf32>
    %27 = arith.mulf %22, %26 : vector<16x16x128xf32>
    %28 = arith.addf %21, %27 : vector<16x16x128xf32>
    %c0_30 = arith.constant 0 : index
    %c1_31 = arith.constant 1 : index
    %c0_32 = arith.constant 0 : index
    %29 = vector.load %arg9[%c0_30, %c1_31, %c0_32] : memref<18x18x128xf32, #tpu.memory_space<vmem>>, vector<16x16x128xf32>
    %30 = vector.extract_strided_slice %20 {offsets = [1, 0], sizes = [1, 128], strides = [1, 1]} : vector<9x128xf32> to vector<1x128xf32>
    %31 = vector.shape_cast %30 : vector<1x128xf32> to vector<128xf32>
    %32 = vector.shape_cast %31 : vector<128xf32> to vector<1x1x128xf32>
    %33 = vector.broadcast %32 : vector<1x1x128xf32> to vector<16x16x128xf32>
    %34 = arith.mulf %29, %33 : vector<16x16x128xf32>
    %35 = arith.addf %28, %34 : vector<16x16x128xf32>
    %c0_33 = arith.constant 0 : index
    %c2 = arith.constant 2 : index
    %c0_34 = arith.constant 0 : index
    %36 = vector.load %arg9[%c0_33, %c2, %c0_34] : memref<18x18x128xf32, #tpu.memory_space<vmem>>, vector<16x16x128xf32>
    %37 = vector.extract_strided_slice %20 {offsets = [2, 0], sizes = [1, 128], strides = [1, 1]} : vector<9x128xf32> to vector<1x128xf32>
    %38 = vector.shape_cast %37 : vector<1x128xf32> to vector<128xf32>
    %39 = vector.shape_cast %38 : vector<128xf32> to vector<1x1x128xf32>
    %40 = vector.broadcast %39 : vector<1x1x128xf32> to vector<16x16x128xf32>
    %41 = arith.mulf %36, %40 : vector<16x16x128xf32>
    %42 = arith.addf %35, %41 : vector<16x16x128xf32>
    %c1_35 = arith.constant 1 : index
    %c0_36 = arith.constant 0 : index
    %c0_37 = arith.constant 0 : index
    %43 = vector.load %arg9[%c1_35, %c0_36, %c0_37] : memref<18x18x128xf32, #tpu.memory_space<vmem>>, vector<16x16x128xf32>
    %44 = vector.extract_strided_slice %20 {offsets = [3, 0], sizes = [1, 128], strides = [1, 1]} : vector<9x128xf32> to vector<1x128xf32>
    %45 = vector.shape_cast %44 : vector<1x128xf32> to vector<128xf32>
    %46 = vector.shape_cast %45 : vector<128xf32> to vector<1x1x128xf32>
    %47 = vector.broadcast %46 : vector<1x1x128xf32> to vector<16x16x128xf32>
    %48 = arith.mulf %43, %47 : vector<16x16x128xf32>
    %49 = arith.addf %42, %48 : vector<16x16x128xf32>
    %c1_38 = arith.constant 1 : index
    %c1_39 = arith.constant 1 : index
    %c0_40 = arith.constant 0 : index
    %50 = vector.load %arg9[%c1_38, %c1_39, %c0_40] : memref<18x18x128xf32, #tpu.memory_space<vmem>>, vector<16x16x128xf32>
    %51 = vector.extract_strided_slice %20 {offsets = [4, 0], sizes = [1, 128], strides = [1, 1]} : vector<9x128xf32> to vector<1x128xf32>
    %52 = vector.shape_cast %51 : vector<1x128xf32> to vector<128xf32>
    %53 = vector.shape_cast %52 : vector<128xf32> to vector<1x1x128xf32>
    %54 = vector.broadcast %53 : vector<1x1x128xf32> to vector<16x16x128xf32>
    %55 = arith.mulf %50, %54 : vector<16x16x128xf32>
    %56 = arith.addf %49, %55 : vector<16x16x128xf32>
    %c1_41 = arith.constant 1 : index
    %c2_42 = arith.constant 2 : index
    %c0_43 = arith.constant 0 : index
    %57 = vector.load %arg9[%c1_41, %c2_42, %c0_43] : memref<18x18x128xf32, #tpu.memory_space<vmem>>, vector<16x16x128xf32>
    %58 = vector.extract_strided_slice %20 {offsets = [5, 0], sizes = [1, 128], strides = [1, 1]} : vector<9x128xf32> to vector<1x128xf32>
    %59 = vector.shape_cast %58 : vector<1x128xf32> to vector<128xf32>
    %60 = vector.shape_cast %59 : vector<128xf32> to vector<1x1x128xf32>
    %61 = vector.broadcast %60 : vector<1x1x128xf32> to vector<16x16x128xf32>
    %62 = arith.mulf %57, %61 : vector<16x16x128xf32>
    %63 = arith.addf %56, %62 : vector<16x16x128xf32>
    %c2_44 = arith.constant 2 : index
    %c0_45 = arith.constant 0 : index
    %c0_46 = arith.constant 0 : index
    %64 = vector.load %arg9[%c2_44, %c0_45, %c0_46] : memref<18x18x128xf32, #tpu.memory_space<vmem>>, vector<16x16x128xf32>
    %65 = vector.extract_strided_slice %20 {offsets = [6, 0], sizes = [1, 128], strides = [1, 1]} : vector<9x128xf32> to vector<1x128xf32>
    %66 = vector.shape_cast %65 : vector<1x128xf32> to vector<128xf32>
    %67 = vector.shape_cast %66 : vector<128xf32> to vector<1x1x128xf32>
    %68 = vector.broadcast %67 : vector<1x1x128xf32> to vector<16x16x128xf32>
    %69 = arith.mulf %64, %68 : vector<16x16x128xf32>
    %70 = arith.addf %63, %69 : vector<16x16x128xf32>
    %c2_47 = arith.constant 2 : index
    %c1_48 = arith.constant 1 : index
    %c0_49 = arith.constant 0 : index
    %71 = vector.load %arg9[%c2_47, %c1_48, %c0_49] : memref<18x18x128xf32, #tpu.memory_space<vmem>>, vector<16x16x128xf32>
    %72 = vector.extract_strided_slice %20 {offsets = [7, 0], sizes = [1, 128], strides = [1, 1]} : vector<9x128xf32> to vector<1x128xf32>
    %73 = vector.shape_cast %72 : vector<1x128xf32> to vector<128xf32>
    %74 = vector.shape_cast %73 : vector<128xf32> to vector<1x1x128xf32>
    %75 = vector.broadcast %74 : vector<1x1x128xf32> to vector<16x16x128xf32>
    %76 = arith.mulf %71, %75 : vector<16x16x128xf32>
    %77 = arith.addf %70, %76 : vector<16x16x128xf32>
    %c2_50 = arith.constant 2 : index
    %c2_51 = arith.constant 2 : index
    %c0_52 = arith.constant 0 : index
    %78 = vector.load %arg9[%c2_50, %c2_51, %c0_52] : memref<18x18x128xf32, #tpu.memory_space<vmem>>, vector<16x16x128xf32>
    %79 = vector.extract_strided_slice %20 {offsets = [8, 0], sizes = [1, 128], strides = [1, 1]} : vector<9x128xf32> to vector<1x128xf32>
    %80 = vector.shape_cast %79 : vector<1x128xf32> to vector<128xf32>
    %81 = vector.shape_cast %80 : vector<128xf32> to vector<1x1x128xf32>
    %82 = vector.broadcast %81 : vector<1x1x128xf32> to vector<16x16x128xf32>
    %83 = arith.mulf %78, %82 : vector<16x16x128xf32>
    %84 = arith.addf %77, %83 : vector<16x16x128xf32>
    %c0_53 = arith.constant 0 : index
    %c0_54 = arith.constant 0 : index
    %85 = vector.load %arg5[%c0_53, %c0_54] : memref<1x128xf32, #tpu.memory_space<vmem>>, vector<1x128xf32>
    %86 = vector.shape_cast %85 : vector<1x128xf32> to vector<1x1x128xf32>
    %87 = vector.broadcast %86 : vector<1x1x128xf32> to vector<16x16x128xf32>
    %88 = arith.addf %84, %87 : vector<16x16x128xf32>
    %89 = vector.extract_strided_slice %8 {offsets = [0, 128], sizes = [256, 128], strides = [1, 1]} : vector<256x256xf32> to vector<256x128xf32>
    %cst_55 = arith.constant 5.000000e-01 : f32
    %90 = vector.broadcast %cst_55 : f32 to vector<16x16x128xf32>
    %91 = arith.mulf %90, %88 : vector<16x16x128xf32>
    %cst_56 = arith.constant 4.471500e-02 : f32
    %92 = vector.broadcast %cst_56 : f32 to vector<16x16x128xf32>
    %93 = arith.mulf %92, %88 : vector<16x16x128xf32>
    %94 = arith.mulf %93, %88 : vector<16x16x128xf32>
    %95 = arith.mulf %94, %88 : vector<16x16x128xf32>
    %96 = arith.addf %88, %95 : vector<16x16x128xf32>
    %cst_57 = arith.constant 0.797884583 : f32
    %97 = vector.broadcast %cst_57 : f32 to vector<16x16x128xf32>
    %98 = arith.mulf %97, %96 : vector<16x16x128xf32>
    %99 = math.tanh %98 : vector<16x16x128xf32>
    %cst_58 = arith.constant 1.000000e+00 : f32
    %100 = vector.broadcast %cst_58 : f32 to vector<16x16x128xf32>
    %101 = arith.addf %100, %99 : vector<16x16x128xf32>
    %102 = arith.mulf %91, %101 : vector<16x16x128xf32>
    %103 = vector.shape_cast %102 : vector<16x16x128xf32> to vector<256x128xf32>
    %104 = arith.mulf %103, %89 : vector<256x128xf32>
    %105 = arith.truncf %104 : vector<256x128xf32> to vector<256x128xbf16>
    %c0_59 = arith.constant 0 : index
    %c0_60 = arith.constant 0 : index
    %106 = vector.load %arg6[%c0_59, %c0_60] : memref<128x256xbf16, #tpu.memory_space<vmem>>, vector<128x256xbf16>
    %cst_61 = arith.constant dense<0.000000e+00> : vector<256x256xf32>
    %107 = tpu.matmul %105, %106, %cst_61 {dimension_numbers = #tpu.dot_dimension_numbers<[1], [0], [0], [1], [0, 0, 1, 1], [], []>} : vector<256x128xbf16>, vector<128x256xbf16>, vector<256x256xf32> -> vector<256x256xf32>
    %c0_62 = arith.constant 0 : index
    %c0_63 = arith.constant 0 : index
    %108 = vector.load %arg7[%c0_62, %c0_63] : memref<1x256xf32, #tpu.memory_space<vmem>>, vector<1x256xf32>
    %109 = vector.broadcast %108 : vector<1x256xf32> to vector<256x256xf32>
    %110 = arith.addf %107, %109 : vector<256x256xf32>
    %111 = vector.shape_cast %110 : vector<256x256xf32> to vector<1x16x16x256xf32>
    %c0_64 = arith.constant 0 : index
    %c0_65 = arith.constant 0 : index
    %c0_66 = arith.constant 0 : index
    %c0_67 = arith.constant 0 : index
    %112 = vector.load %arg8[%c0_64, %c0_65, %c0_66, %c0_67] : memref<1x16x16x256xf32, #tpu.memory_space<vmem>>, vector<1x16x16x256xf32>
    tpu.vector_store %arg8[%c0_64, %c0_65, %c0_66, %c0_67], %111 {strides = array<i32>} : memref<1x16x16x256xf32, #tpu.memory_space<vmem>>, vector<1x16x16x256xf32>,
    return
  }
  func.func @transform_0(%arg0: i32) -> (i32, i32, i32, i32) {
    %c0_i32 = arith.constant 0 : i32
    %c0_i32_0 = arith.constant 0 : i32
    %c0_i32_1 = arith.constant 0 : i32
    %c0_i32_2 = arith.constant 0 : i32
    return %arg0, %c0_i32, %c0_i32_0, %c0_i32_1 : i32, i32, i32, i32
  }
  func.func @transform_1(%arg0: i32) -> (i32, i32) {
    %c0_i32 = arith.constant 0 : i32
    %c0_i32_0 = arith.constant 0 : i32
    %c0_i32_1 = arith.constant 0 : i32
    return %c0_i32, %c0_i32_0 : i32, i32
  }
  func.func @transform_2(%arg0: i32) -> (i32, i32) {
    %c0_i32 = arith.constant 0 : i32
    %c0_i32_0 = arith.constant 0 : i32
    %c0_i32_1 = arith.constant 0 : i32
    return %c0_i32, %c0_i32_0 : i32, i32
  }
  func.func @transform_3(%arg0: i32) -> (i32, i32) {
    %c0_i32 = arith.constant 0 : i32
    %c0_i32_0 = arith.constant 0 : i32
    %c0_i32_1 = arith.constant 0 : i32
    return %c0_i32, %c0_i32_0 : i32, i32
  }
  func.func @transform_4(%arg0: i32) -> (i32, i32) {
    %c0_i32 = arith.constant 0 : i32
    %c0_i32_0 = arith.constant 0 : i32
    %c0_i32_1 = arith.constant 0 : i32
    return %c0_i32, %c0_i32_0 : i32, i32
  }
  func.func @transform_5(%arg0: i32) -> (i32, i32) {
    %c0_i32 = arith.constant 0 : i32
    %c0_i32_0 = arith.constant 0 : i32
    %c0_i32_1 = arith.constant 0 : i32
    return %c0_i32, %c0_i32_0 : i32, i32
  }
  func.func @transform_6(%arg0: i32) -> (i32, i32) {
    %c0_i32 = arith.constant 0 : i32
    %c0_i32_0 = arith.constant 0 : i32
    %c0_i32_1 = arith.constant 0 : i32
    return %c0_i32, %c0_i32_0 : i32, i32
  }
  func.func @transform_7(%arg0: i32) -> (i32, i32, i32, i32) {
    %c0_i32 = arith.constant 0 : i32
    %c0_i32_0 = arith.constant 0 : i32
    %c0_i32_1 = arith.constant 0 : i32
    %c0_i32_2 = arith.constant 0 : i32
    return %arg0, %c0_i32, %c0_i32_0, %c0_i32_1 : i32, i32, i32, i32
  }
}

</mosaic_0001>

<llo_original>
// kernel: conv_glu.1
$region0: #{conv_glu.1}
  #allocation0 [shape = 'u32[]', space=smem, size = 0x4, offset = 0x4, fixed_abs, tag = 'smem constant byte address 0x4 - core index']
  #allocation1 [shape = 'u32[144,128]{1,0:T(1,128)}', space=vmem, size = 0x12000, scoped, tag = 'internal scratch']
  #allocation2 [shape = 'f32[18,18,128]{2,1,0:T(8,128)}', space=vmem, size = 0x36000, scoped, tag = 'scratch operand']
  %s0 = inlined_call_operand.hbm [shape: f32[2,16,16,256], index: 0, kind: input, shape index: {}]
  %s1 = inlined_call_operand.vmem [shape: bf16[256,256], index: 1, kind: input, shape index: {}]
  %s2 = inlined_call_operand.vmem [shape: f32[1,256], index: 2, kind: input, shape index: {}]
  %s3 = inlined_call_operand.vmem [shape: f32[9,128], index: 3, kind: input, shape index: {}]
  %s4 = inlined_call_operand.vmem [shape: f32[1,128], index: 4, kind: input, shape index: {}]
  %s5 = inlined_call_operand.vmem [shape: bf16[128,256], index: 5, kind: input, shape index: {}]
  %s6 = inlined_call_operand.vmem [shape: f32[1,256], index: 6, kind: input, shape index: {}]
  %s7 = inlined_call_operand.hbm [shape: f32[2,16,16,256], index: 7, kind: output, shape index: {}]
  %s8 = sld [smem:[#allocation0]]
  $region65: #{conv_glu.1} parent=0
    _
  %s10 = ssub.s32 1, %s8
  %s11 = scalar_select 0, %s10, %s8
  $region1: #{conv_glu.1} parent=0
    #allocation3 [shape = 'u8[524288]{0}', space=vmem, size = 0x80000, scoped, tag = 'input window, operand 0']
    #allocation4 [shape = 's32[2]{0}', space=sflag, size = 0x8, scoped, tag = 'scoped memory for conv_glu.1']
    #allocation5 [shape = 's32[2]{0}', space=sflag, size = 0x8, scoped, tag = 'scoped memory for conv_glu.1']
    #allocation6 [shape = 'u8[524288]{0}', space=vmem, size = 0x80000, scoped, tag = 'output window, operand 0']
    %12 = vsyncpa [#allocation4], 0
    %s13 = scalar_lea.sflag [#allocation4], 1
    %14 = vsyncpa %s13, 0
    %15 = vsyncpa [#allocation5], 0
    %s16 = scalar_lea.sflag [#allocation5], 1
    %17 = vsyncpa %s16, 0
    loop: start=0, step=1, limit=4
    $region2: #{conv_glu.1} parent=1 // loop_pre_header
      _
    $region3: #{conv_glu.1} parent=1 // loop_header
      %s19 = sphi 0, %s23
      %p20 = scmp.ge.s32.totalorder %s19, 4
      %s29 = sphi 0, %s31
      %s32 = sphi 0, %s29
      %s33 = sphi 0, %s32
      %s49 = sphi 0, %s33
      %s53 = sphi 0, %s53
      %s55 = sphi 0, %s53
      %s56 = sphi 0, %s55
      %s70 = sphi 0, %s56
      %s74 = sphi 0, %s74
      %s76 = sphi 0, %s74
      %s77 = sphi 0, %s76
      %s91 = sphi 0, %s77
      %s95 = sphi 0, %s95
      %s97 = sphi 0, %s95
      %s98 = sphi 0, %s97
      %s112 = sphi 0, %s98
      %s116 = sphi 0, %s116
      %s118 = sphi 0, %s116
      %s119 = sphi 0, %s118
      %s133 = sphi 0, %s119
      %s137 = sphi 0, %s137
      %s139 = sphi 0, %s137
      %s140 = sphi 0, %s139
      %s154 = sphi 0, %s140
      %s158 = sphi 0, %s158
      %s160 = sphi 0, %s158
      %s161 = sphi 0, %s160
      %s175 = sphi 0, %s161
      %s181 = sphi 0, %s183
      %s184 = sphi 0, %s181
      %s185 = sphi 0, %s184
      %s201 = sphi 0, %s185
    $region4: #{conv_glu.1} parent=1 // loop_header_branch
      %22 = sbr.rel (%p20) target = $region8
    $region5: #{conv_glu.1} parent=1 // loop_body
      %s24 = ssub.s32 %s19, 1
      %s25 = ssub.s32 %s19, 2
      %s26 = sadd.s32 %s19, 1
      %s27 = ssub.s32 %s19, %s26
      %p28 = scmp.eq.s32.totalorder %s27, 0
      %s30 = sadd.s32 %s29, 1
      %s31 = scalar_select %p28, %s29, %s30
      %p34 = pneg %p28
      %p35 = scmp.eq.s32.totalorder %s19, 1
      %p36 = por %p34, %p35
      %p37 = scmp.ne.s32.totalorder %s29, %s32
      %p38 = scmp.eq.s32.totalorder %s19, 0
      %p39 = por %p37, %p38
      %p40 = scmp.ne.s32.totalorder %s29, %s32
      %p41 = scmp.eq.s32.totalorder %s24, 1
      %p42 = por %p40, %p41
      %p43 = scmp.ne.s32.totalorder %s32, %s33
      %p44 = scmp.eq.s32.totalorder %s24, 0
      %p45 = por %p43, %p44
      %p46 = scmp.ne.s32.totalorder %s32, %s33
      %p47 = scmp.eq.s32.totalorder %s25, 1
      %p48 = por %p46, %p47
      %p50 = scmp.ne.s32.totalorder %s33, %s49
      %p51 = scmp.eq.s32.totalorder %s25, 0
      %p52 = por %p50, %p51
      %s54 = sadd.s32 %s53, 1
      %p57 = scmp.eq.s32.totalorder %s19, 1
      %p58 = scmp.ne.s32.totalorder %s53, %s55
      %p59 = scmp.eq.s32.totalorder %s19, 0
      %p60 = por %p58, %p59
      %p61 = scmp.ne.s32.totalorder %s53, %s55
      %p62 = scmp.eq.s32.totalorder %s24, 1
      %p63 = por %p61, %p62
      %p64 = scmp.ne.s32.totalorder %s55, %s56
      %p65 = scmp.eq.s32.totalorder %s24, 0
      %p66 = por %p64, %p65
      %p67 = scmp.ne.s32.totalorder %s55, %s56
      %p68 = scmp.eq.s32.totalorder %s25, 1
      %p69 = por %p67, %p68
      %p71 = scmp.ne.s32.totalorder %s56, %s70
      %p72 = scmp.eq.s32.totalorder %s25, 0
      %p73 = por %p71, %p72
      %s75 = sadd.s32 %s74, 1
      %p78 = scmp.eq.s32.totalorder %s19, 1
      %p79 = scmp.ne.s32.totalorder %s74, %s76
      %p80 = scmp.eq.s32.totalorder %s19, 0
      %p81 = por %p79, %p80
      %p82 = scmp.ne.s32.totalorder %s74, %s76
      %p83 = scmp.eq.s32.totalorder %s24, 1
      %p84 = por %p82, %p83
      %p85 = scmp.ne.s32.totalorder %s76, %s77
      %p86 = scmp.eq.s32.totalorder %s24, 0
      %p87 = por %p85, %p86
      %p88 = scmp.ne.s32.totalorder %s76, %s77
      %p89 = scmp.eq.s32.totalorder %s25, 1
      %p90 = por %p88, %p89
      %p92 = scmp.ne.s32.totalorder %s77, %s91
      %p93 = scmp.eq.s32.totalorder %s25, 0
      %p94 = por %p92, %p93
      %s96 = sadd.s32 %s95, 1
      %p99 = scmp.eq.s32.totalorder %s19, 1
      %p100 = scmp.ne.s32.totalorder %s95, %s97
      %p101 = scmp.eq.s32.totalorder %s19, 0
      %p102 = por %p100, %p101
      %p103 = scmp.ne.s32.totalorder %s95, %s97
      %p104 = scmp.eq.s32.totalorder %s24, 1
      %p105 = por %p103, %p104
      %p106 = scmp.ne.s32.totalorder %s97, %s98
      %p107 = scmp.eq.s32.totalorder %s24, 0
      %p108 = por %p106, %p107
      %p109 = scmp.ne.s32.totalorder %s97, %s98
      %p110 = scmp.eq.s32.totalorder %s25, 1
      %p111 = por %p109, %p110
      %p113 = scmp.ne.s32.totalorder %s98, %s112
      %p114 = scmp.eq.s32.totalorder %s25, 0
      %p115 = por %p113, %p114
      %s117 = sadd.s32 %s116, 1
      %p120 = scmp.eq.s32.totalorder %s19, 1
      %p121 = scmp.ne.s32.totalorder %s116, %s118
      %p122 = scmp.eq.s32.totalorder %s19, 0
      %p123 = por %p121, %p122
      %p124 = scmp.ne.s32.totalorder %s116, %s118
      %p125 = scmp.eq.s32.totalorder %s24, 1
      %p126 = por %p124, %p125
      %p127 = scmp.ne.s32.totalorder %s118, %s119
      %p128 = scmp.eq.s32.totalorder %s24, 0
      %p129 = por %p127, %p128
      %p130 = scmp.ne.s32.totalorder %s118, %s119
      %p131 = scmp.eq.s32.totalorder %s25, 1
      %p132 = por %p130, %p131
      %p134 = scmp.ne.s32.totalorder %s119, %s133
      %p135 = scmp.eq.s32.totalorder %s25, 0
      %p136 = por %p134, %p135
      %s138 = sadd.s32 %s137, 1
      %p141 = scmp.eq.s32.totalorder %s19, 1
      %p142 = scmp.ne.s32.totalorder %s137, %s139
      %p143 = scmp.eq.s32.totalorder %s19, 0
      %p144 = por %p142, %p143
      %p145 = scmp.ne.s32.totalorder %s137, %s139
      %p146 = scmp.eq.s32.totalorder %s24, 1
      %p147 = por %p145, %p146
      %p148 = scmp.ne.s32.totalorder %s139, %s140
      %p149 = scmp.eq.s32.totalorder %s24, 0
      %p150 = por %p148, %p149
      %p151 = scmp.ne.s32.totalorder %s139, %s140
      %p152 = scmp.eq.s32.totalorder %s25, 1
      %p153 = por %p151, %p152
      %p155 = scmp.ne.s32.totalorder %s140, %s154
      %p156 = scmp.eq.s32.totalorder %s25, 0
      %p157 = por %p155, %p156
      %s159 = sadd.s32 %s158, 1
      %p162 = scmp.eq.s32.totalorder %s19, 1
      %p163 = scmp.ne.s32.totalorder %s158, %s160
      %p164 = scmp.eq.s32.totalorder %s19, 0
      %p165 = por %p163, %p164
      %p166 = scmp.ne.s32.totalorder %s158, %s160
      %p167 = scmp.eq.s32.totalorder %s24, 1
      %p168 = por %p166, %p167
      %p169 = scmp.ne.s32.totalorder %s160, %s161
      %p170 = scmp.eq.s32.totalorder %s24, 0
      %p171 = por %p169, %p170
      %p172 = scmp.ne.s32.totalorder %s160, %s161
      %p173 = scmp.eq.s32.totalorder %s25, 1
      %p174 = por %p172, %p173
      %p176 = scmp.ne.s32.totalorder %s161, %s175
      %p177 = scmp.eq.s32.totalorder %s25, 0
      %p178 = por %p176, %p177
      %s179 = ssub.s32 %s19, %s26
      %p180 = scmp.eq.s32.totalorder %s179, 0
      %s182 = sadd.s32 %s181, 1
      %s183 = scalar_select %p180, %s181, %s182
      %p186 = pneg %p180
      %p187 = scmp.eq.s32.totalorder %s19, 1
      %p188 = por %p186, %p187
      %p189 = scmp.ne.s32.totalorder %s181, %s184
      %p190 = scmp.eq.s32.totalorder %s19, 0
      %p191 = por %p189, %p190
      %p192 = scmp.ne.s32.totalorder %s181, %s184
      %p193 = scmp.eq.s32.totalorder %s24, 1
      %p194 = por %p192, %p193
      %p195 = scmp.ne.s32.totalorder %s184, %s185
      %p196 = scmp.eq.s32.totalorder %s24, 0
      %p197 = por %p195, %p196
      %p198 = scmp.ne.s32.totalorder %s184, %s185
      %p199 = scmp.eq.s32.totalorder %s25, 1
      %p200 = por %p198, %p199
      %p202 = scmp.ne.s32.totalorder %s185, %s201
      %p203 = scmp.eq.s32.totalorder %s25, 0
      %p204 = por %p202, %p203
      %p205 = scmp.le.s32.totalorder 1, %s19
      %p206 = scmp.lt.s32.totalorder %s19, 3
      %p207 = pnand %p205, %p206
      %p208 = pneg %p207
      // Predicated region
      $region9: #{conv_glu.1} parent=5 // pred_check
        _
      $region10: #{conv_glu.1} parent=5 // pred_check_branch
        %210 = sbr.rel (%p207) target = $region12
      $region11: #{conv_glu.1} parent=5 // pred_region
        %s211 = ssub.s32 %s19, 1
        // Predicated region
        $region13: #{conv_glu.1} parent=11 // pred_check
          %p212 = pneg %p66
        $region14: #{conv_glu.1} parent=11 // pred_check_branch
          %214 = sbr.rel (%p212) target = $region16
        $region15: #{conv_glu.1} parent=11 // pred_region
          _
        $region16: #{conv_glu.1} parent=11 // pred_fallthru
          _
        // Predicated region
        $region17: #{conv_glu.1} parent=11 // pred_check
          %p215 = pneg %p87
        $region18: #{conv_glu.1} parent=11 // pred_check_branch
          %217 = sbr.rel (%p215) target = $region20
        $region19: #{conv_glu.1} parent=11 // pred_region
          _
        $region20: #{conv_glu.1} parent=11 // pred_fallthru
          _
        // Predicated region
        $region21: #{conv_glu.1} parent=11 // pred_check
          %p218 = pneg %p108
        $region22: #{conv_glu.1} parent=11 // pred_check_branch
          %220 = sbr.rel (%p218) target = $region24
        $region23: #{conv_glu.1} parent=11 // pred_region
          _
        $region24: #{conv_glu.1} parent=11 // pred_fallthru
          _
        // Predicated region
        $region25: #{conv_glu.1} parent=11 // pred_check
          %p221 = pneg %p129
        $region26: #{conv_glu.1} parent=11 // pred_check_branch
          %223 = sbr.rel (%p221) target = $region28
        $region27: #{conv_glu.1} parent=11 // pred_region
          _
        $region28: #{conv_glu.1} parent=11 // pred_fallthru
          _
        // Predicated region
        $region29: #{conv_glu.1} parent=11 // pred_check
          %p224 = pneg %p150
        $region30: #{conv_glu.1} parent=11 // pred_check_branch
          %226 = sbr.rel (%p224) target = $region32
        $region31: #{conv_glu.1} parent=11 // pred_region
          _
        $region32: #{conv_glu.1} parent=11 // pred_fallthru
          _
        // Predicated region
        $region33: #{conv_glu.1} parent=11 // pred_check
          %p227 = pneg %p171
        $region34: #{conv_glu.1} parent=11 // pred_check_branch
          %229 = sbr.rel (%p227) target = $region36
        $region35: #{conv_glu.1} parent=11 // pred_region
          _
        $region36: #{conv_glu.1} parent=11 // pred_fallthru
          _
      $region12: #{conv_glu.1} parent=5 // pred_fallthru
        _
      %p230 = scmp.lt.s32.totalorder %s19, 2
      // Predicated region
      $region37: #{conv_glu.1} parent=5 // pred_check
        %p231 = pneg %p230
      $region38: #{conv_glu.1} parent=5 // pred_check_branch
        %233 = sbr.rel (%p231) target = $region40
      $region39: #{conv_glu.1} parent=5 // pred_region
        // Predicated region
        $region41: #{conv_glu.1} parent=39 // pred_check
          %p234 = pneg %p39
        $region42: #{conv_glu.1} parent=39 // pred_check_branch
          %236 = sbr.rel (%p234) target = $region44
        $region43: #{conv_glu.1} parent=39 // pred_region
          %s237 = sand.u32 %s29, 1
          %s238 = scalar_lea.sflag [#allocation4], %s237
          %s239 = sand.u32 %s29, 1
          %s240 = smul.addr %s239, 512
          %s241 = scalar_lea.vmem [#allocation3], %s240
          %s243 = ssub.s32 8192, 8192
          %244 = vsyncadd %s238, %s243
          %s245 = smul.addr %s19, 64
          %s246 = smul.addr %s245, 128
          %s247 = scalar_lea.hbm %s0, %s246
          %s248 = sshll.u32 %s241, 4
          %s249 = int_to_ptr.vmem [resolvable:$true] %s248
          %254 = dma.hbm_to_vmem [thread:$0]  %s247, 8192, %s249, %s238, 256, 256, 16
        $region44: #{conv_glu.1} parent=39 // pred_fallthru
          _
      $region40: #{conv_glu.1} parent=5 // pred_fallthru
        _
      %p255 = scmp.le.s32.totalorder 1, %s19
      %p256 = scmp.lt.s32.totalorder %s19, 3
      %p257 = pnand %p255, %p256
      %p258 = pneg %p257
      // Predicated region
      $region45: #{conv_glu.1} parent=5 // pred_check
        _
      $region46: #{conv_glu.1} parent=5 // pred_check_branch
        %260 = sbr.rel (%p257) target = $region48
      $region47: #{conv_glu.1} parent=5 // pred_region
        %s261 = ssub.s32 %s19, 1
        %s262 = sand.u32 %s32, 1
        %s263 = scalar_lea.sflag [#allocation4], %s262
        %s264 = sand.u32 %s32, 1
        %s265 = smul.addr %s264, 512
        %s266 = scalar_lea.vmem [#allocation3], %s265
        // Predicated region
        $region49: #{conv_glu.1} parent=47 // pred_check
          %p267 = pneg %p45
        $region50: #{conv_glu.1} parent=47 // pred_check_branch
          %269 = sbr.rel (%p267) target = $region52
        $region51: #{conv_glu.1} parent=47 // pred_region
          %270 = dma.done %s263, 8192
        $region52: #{conv_glu.1} parent=47 // pred_fallthru
          _
        %s271 = sand.u32 %s32, 1
        %s272 = scalar_lea.sflag [#allocation4], %s271
        %s273 = sand.u32 %s32, 1
        %s274 = smul.addr %s273, 512
        %s275 = scalar_lea.vmem [#allocation3], %s274
        %p276 = pneg %p45
        %p277 = pneg %p42
        %p278 = pneg %p66
        %p279 = pneg %p63
        %p280 = pneg %p87
        %p281 = pneg %p84
        %p282 = pneg %p108
        %p283 = pneg %p105
        %p284 = pneg %p129
        %p285 = pneg %p126
        %p286 = pneg %p150
        %p287 = pneg %p147
        %p288 = pneg %p171
        %p289 = pneg %p168
        %p290 = pneg %p197
        %p291 = pneg %p194
        %s292 = sand.u32 %s184, 1
        %s293 = scalar_lea.sflag [#allocation5], %s292
        %s294 = sand.u32 %s184, 1
        %s295 = smul.addr %s294, 512
        %s296 = scalar_lea.vmem [#allocation6], %s295
        %v298 = vld [vmem:[%s266] sm:$0xff]
        %v299 = vld [vmem:[%s266 + $0x8] sm:$0xff]
        %v300 = vld [vmem:[%s266 + $0x10] sm:$0xff]
        %v301 = vld [vmem:[%s266 + $0x18] sm:$0xff]
        %v302 = vld [vmem:[%s266 + $0x20] sm:$0xff]
        %v303 = vld [vmem:[%s266 + $0x28] sm:$0xff]
        %v304 = vld [vmem:[%s266 + $0x30] sm:$0xff]
        %v305 = vld [vmem:[%s266 + $0x38] sm:$0xff]
        %v306 = vld [vmem:[%s266 + $0x40] sm:$0xff]
        %v307 = vld [vmem:[%s266 + $0x48] sm:$0xff]
        %v308 = vld [vmem:[%s266 + $0x50] sm:$0xff]
        %v309 = vld [vmem:[%s266 + $0x58] sm:$0xff]
        %v310 = vld [vmem:[%s266 + $0x60] sm:$0xff]
        %v311 = vld [vmem:[%s266 + $0x68] sm:$0xff]
        %v312 = vld [vmem:[%s266 + $0x70] sm:$0xff]
        %v313 = vld [vmem:[%s266 + $0x78] sm:$0xff]
        %v314 = vld [vmem:[%s266 + $0x80] sm:$0xff]
        %v315 = vld [vmem:[%s266 + $0x88] sm:$0xff]
        %v316 = vld [vmem:[%s266 + $0x90] sm:$0xff]
        %v317 = vld [vmem:[%s266 + $0x98] sm:$0xff]
        %v318 = vld [vmem:[%s266 + $0xa0] sm:$0xff]
        %v319 = vld [vmem:[%s266 + $0xa8] sm:$0xff]
        %v320 = vld [vmem:[%s266 + $0xb0] sm:$0xff]
        %v321 = vld [vmem:[%s266 + $0xb8] sm:$0xff]
        %v322 = vld [vmem:[%s266 + $0xc0] sm:$0xff]
        %v323 = vld [vmem:[%s266 + $0xc8] sm:$0xff]
        %v324 = vld [vmem:[%s266 + $0xd0] sm:$0xff]
        %v325 = vld [vmem:[%s266 + $0xd8] sm:$0xff]
        %v326 = vld [vmem:[%s266 + $0xe0] sm:$0xff]
        %v327 = vld [vmem:[%s266 + $0xe8] sm:$0xff]
        %v328 = vld [vmem:[%s266 + $0xf0] sm:$0xff]
        %v329 = vld [vmem:[%s266 + $0xf8] sm:$0xff]
        %v330 = vld [vmem:[%s266 + $0x100] sm:$0xff]
        %v331 = vld [vmem:[%s266 + $0x108] sm:$0xff]
        %v332 = vld [vmem:[%s266 + $0x110] sm:$0xff]
        %v333 = vld [vmem:[%s266 + $0x118] sm:$0xff]
        %v334 = vld [vmem:[%s266 + $0x120] sm:$0xff]
        %v335 = vld [vmem:[%s266 + $0x128] sm:$0xff]
        %v336 = vld [vmem:[%s266 + $0x130] sm:$0xff]
        %v337 = vld [vmem:[%s266 + $0x138] sm:$0xff]
        %v338 = vld [vmem:[%s266 + $0x140] sm:$0xff]
        %v339 = vld [vmem:[%s266 + $0x148] sm:$0xff]
        %v340 = vld [vmem:[%s266 + $0x150] sm:$0xff]
        %v341 = vld [vmem:[%s266 + $0x158] sm:$0xff]
        %v342 = vld [vmem:[%s266 + $0x160] sm:$0xff]
        %v343 = vld [vmem:[%s266 + $0x168] sm:$0xff]
        %v344 = vld [vmem:[%s266 + $0x170] sm:$0xff]
        %v345 = vld [vmem:[%s266 + $0x178] sm:$0xff]
        %v346 = vld [vmem:[%s266 + $0x180] sm:$0xff]
        %v347 = vld [vmem:[%s266 + $0x188] sm:$0xff]
        %v348 = vld [vmem:[%s266 + $0x190] sm:$0xff]
        %v349 = vld [vmem:[%s266 + $0x198] sm:$0xff]
        %v350 = vld [vmem:[%s266 + $0x1a0] sm:$0xff]
        %v351 = vld [vmem:[%s266 + $0x1a8] sm:$0xff]
        %v352 = vld [vmem:[%s266 + $0x1b0] sm:$0xff]
        %v353 = vld [vmem:[%s266 + $0x1b8] sm:$0xff]
        %v354 = vld [vmem:[%s266 + $0x1c0] sm:$0xff]
        %v355 = vld [vmem:[%s266 + $0x1c8] sm:$0xff]
        %v356 = vld [vmem:[%s266 + $0x1d0] sm:$0xff]
        %v357 = vld [vmem:[%s266 + $0x1d8] sm:$0xff]
        %v358 = vld [vmem:[%s266 + $0x1e0] sm:$0xff]
        %v359 = vld [vmem:[%s266 + $0x1e8] sm:$0xff]
        %v360 = vld [vmem:[%s266 + $0x1f0] sm:$0xff]
        %v361 = vld [vmem:[%s266 + $0x1f8] sm:$0xff]
        %v362 = vpack.c.bf16 %v300, %v298
        %v363 = vpack.c.bf16 %v301, %v299
        %v364 = vpack.c.bf16 %v304, %v302
        %v365 = vpack.c.bf16 %v305, %v303
        %v366 = vpack.c.bf16 %v308, %v306
        %v367 = vpack.c.bf16 %v309, %v307
        %v368 = vpack.c.bf16 %v312, %v310
        %v369 = vpack.c.bf16 %v313, %v311
        %v370 = vpack.c.bf16 %v316, %v314
        %v371 = vpack.c.bf16 %v317, %v315
        %v372 = vpack.c.bf16 %v320, %v318
        %v373 = vpack.c.bf16 %v321, %v319
        %v374 = vpack.c.bf16 %v324, %v322
        %v375 = vpack.c.bf16 %v325, %v323
        %v376 = vpack.c.bf16 %v328, %v326
        %v377 = vpack.c.bf16 %v329, %v327
        %v378 = vpack.c.bf16 %v332, %v330
        %v379 = vpack.c.bf16 %v333, %v331
        %v380 = vpack.c.bf16 %v336, %v334
        %v381 = vpack.c.bf16 %v337, %v335
        %v382 = vpack.c.bf16 %v340, %v338
        %v383 = vpack.c.bf16 %v341, %v339
        %v384 = vpack.c.bf16 %v344, %v342
        %v385 = vpack.c.bf16 %v345, %v343
        %v386 = vpack.c.bf16 %v348, %v346
        %v387 = vpack.c.bf16 %v349, %v347
        %v388 = vpack.c.bf16 %v352, %v350
        %v389 = vpack.c.bf16 %v353, %v351
        %v390 = vpack.c.bf16 %v356, %v354
        %v391 = vpack.c.bf16 %v357, %v355
        %v392 = vpack.c.bf16 %v360, %v358
        %v393 = vpack.c.bf16 %v361, %v359
        %v394 = vld [vmem:[%s1] sm:$0xff]
        %v395 = vld [vmem:[%s1 + $0x8] sm:$0xff]
        %v396 = vld [vmem:[%s1 + $0x10] sm:$0xff]
        %v397 = vld [vmem:[%s1 + $0x18] sm:$0xff]
        %v398 = vld [vmem:[%s1 + $0x20] sm:$0xff]
        %v399 = vld [vmem:[%s1 + $0x28] sm:$0xff]
        %v400 = vld [vmem:[%s1 + $0x30] sm:$0xff]
        %v401 = vld [vmem:[%s1 + $0x38] sm:$0xff]
        %v402 = vld [vmem:[%s1 + $0x40] sm:$0xff]
        %v403 = vld [vmem:[%s1 + $0x48] sm:$0xff]
        %v404 = vld [vmem:[%s1 + $0x50] sm:$0xff]
        %v405 = vld [vmem:[%s1 + $0x58] sm:$0xff]
        %v406 = vld [vmem:[%s1 + $0x60] sm:$0xff]
        %v407 = vld [vmem:[%s1 + $0x68] sm:$0xff]
        %v408 = vld [vmem:[%s1 + $0x70] sm:$0xff]
        %v409 = vld [vmem:[%s1 + $0x78] sm:$0xff]
        %v410 = vld [vmem:[%s1 + $0x80] sm:$0xff]
        %v411 = vld [vmem:[%s1 + $0x88] sm:$0xff]
        %v412 = vld [vmem:[%s1 + $0x90] sm:$0xff]
        %v413 = vld [vmem:[%s1 + $0x98] sm:$0xff]
        %v414 = vld [vmem:[%s1 + $0xa0] sm:$0xff]
        %v415 = vld [vmem:[%s1 + $0xa8] sm:$0xff]
        %v416 = vld [vmem:[%s1 + $0xb0] sm:$0xff]
        %v417 = vld [vmem:[%s1 + $0xb8] sm:$0xff]
        %v418 = vld [vmem:[%s1 + $0xc0] sm:$0xff]
        %v419 = vld [vmem:[%s1 + $0xc8] sm:$0xff]
        %v420 = vld [vmem:[%s1 + $0xd0] sm:$0xff]
        %v421 = vld [vmem:[%s1 + $0xd8] sm:$0xff]
        %v422 = vld [vmem:[%s1 + $0xe0] sm:$0xff]
        %v423 = vld [vmem:[%s1 + $0xe8] sm:$0xff]
        %v424 = vld [vmem:[%s1 + $0xf0] sm:$0xff]
        %v425 = vld [vmem:[%s1 + $0xf8] sm:$0xff]
        %v426 = vld [vmem:[%s2] sm:$0x3]
        %v428 = vlaneseq
        %v429 = vshrl.u32 %v428, 7
        %v430 = vsub.s32 0, %v429
        %v431 = vrot.slane %v426, %v430
        %v432 = vlaneseq
        %v433 = vshrl.u32 %v432, 7
        %v434 = vsub.s32 1, %v433
        %v435 = vrot.slane %v426, %v434
        %v470 = vunpack.c.l.b16 %v394
        %v471 = vunpack.c.h.b16 %v394
        %v472 = vunpack.c.l.b16 %v395
        %v473 = vunpack.c.h.b16 %v395
        %v474 = vunpack.c.l.b16 %v396
        %v475 = vunpack.c.h.b16 %v396
        %v476 = vunpack.c.l.b16 %v397
        %v477 = vunpack.c.h.b16 %v397
        %v478 = vunpack.c.l.b16 %v398
        %v479 = vunpack.c.h.b16 %v398
        %v480 = vunpack.c.l.b16 %v399
        %v481 = vunpack.c.h.b16 %v399
        %v482 = vunpack.c.l.b16 %v400
        %v483 = vunpack.c.h.b16 %v400
        %v484 = vunpack.c.l.b16 %v401
        %v485 = vunpack.c.h.b16 %v401
        %v486 = vunpack.c.l.b16 %v402
        %v487 = vunpack.c.h.b16 %v402
        %v488 = vunpack.c.l.b16 %v403
        %v489 = vunpack.c.h.b16 %v403
        %v490 = vunpack.c.l.b16 %v404
        %v491 = vunpack.c.h.b16 %v404
        %v492 = vunpack.c.l.b16 %v405
        %v493 = vunpack.c.h.b16 %v405
        %v494 = vunpack.c.l.b16 %v406
        %v495 = vunpack.c.h.b16 %v406
        %v496 = vunpack.c.l.b16 %v407
        %v497 = vunpack.c.h.b16 %v407
        %v498 = vunpack.c.l.b16 %v408
        %v499 = vunpack.c.h.b16 %v408
        %v500 = vunpack.c.l.b16 %v409
        %v501 = vunpack.c.h.b16 %v409
        %v502 = vunpack.c.l.b16 %v410
        %v503 = vunpack.c.h.b16 %v410
        %v504 = vunpack.c.l.b16 %v411
        %v505 = vunpack.c.h.b16 %v411
        %v506 = vunpack.c.l.b16 %v412
        %v507 = vunpack.c.h.b16 %v412
        %v508 = vunpack.c.l.b16 %v413
        %v509 = vunpack.c.h.b16 %v413
        %v510 = vunpack.c.l.b16 %v414
        %v511 = vunpack.c.h.b16 %v414
        %v512 = vunpack.c.l.b16 %v415
        %v513 = vunpack.c.h.b16 %v415
        %v514 = vunpack.c.l.b16 %v416
        %v515 = vunpack.c.h.b16 %v416
        %v516 = vunpack.c.l.b16 %v417
        %v517 = vunpack.c.h.b16 %v417
        %v518 = vunpack.c.l.b16 %v418
        %v519 = vunpack.c.h.b16 %v418
        %v520 = vunpack.c.l.b16 %v419
        %v521 = vunpack.c.h.b16 %v419
        %v522 = vunpack.c.l.b16 %v420
        %v523 = vunpack.c.h.b16 %v420
        %v524 = vunpack.c.l.b16 %v421
        %v525 = vunpack.c.h.b16 %v421
        %v526 = vunpack.c.l.b16 %v422
        %v527 = vunpack.c.h.b16 %v422
        %v528 = vunpack.c.l.b16 %v423
        %v529 = vunpack.c.h.b16 %v423
        %v530 = vunpack.c.l.b16 %v424
        %v531 = vunpack.c.h.b16 %v424
        %v532 = vunpack.c.l.b16 %v425
        %v533 = vunpack.c.h.b16 %v425
        %v534 = vpack.c.b16 %v472, %v470
        %v535 = vpack.c.b16 %v473, %v471
        %v536 = vpack.c.b16 %v476, %v474
        %v537 = vpack.c.b16 %v477, %v475
        %v538 = vpack.c.b16 %v480, %v478
        %v539 = vpack.c.b16 %v481, %v479
        %v540 = vpack.c.b16 %v484, %v482
        %v541 = vpack.c.b16 %v485, %v483
        %v542 = vpack.c.b16 %v488, %v486
        %v543 = vpack.c.b16 %v489, %v487
        %v544 = vpack.c.b16 %v492, %v490
        %v545 = vpack.c.b16 %v493, %v491
        %v546 = vpack.c.b16 %v496, %v494
        %v547 = vpack.c.b16 %v497, %v495
        %v548 = vpack.c.b16 %v500, %v498
        %v549 = vpack.c.b16 %v501, %v499
        %v550 = vpack.c.b16 %v504, %v502
        %v551 = vpack.c.b16 %v505, %v503
        %v552 = vpack.c.b16 %v508, %v506
        %v553 = vpack.c.b16 %v509, %v507
        %v554 = vpack.c.b16 %v512, %v510
        %v555 = vpack.c.b16 %v513, %v511
        %v556 = vpack.c.b16 %v516, %v514
        %v557 = vpack.c.b16 %v517, %v515
        %v558 = vpack.c.b16 %v520, %v518
        %v559 = vpack.c.b16 %v521, %v519
        %v560 = vpack.c.b16 %v524, %v522
        %v561 = vpack.c.b16 %v525, %v523
        %v562 = vpack.c.b16 %v528, %v526
        %v563 = vpack.c.b16 %v529, %v527
        %v564 = vpack.c.b16 %v532, %v530
        %v565 = vpack.c.b16 %v533, %v531
        %598 = vmatprep.subr.bf16.mxu0 %v535
        %599 = vmatpush1.bf16.msra.mxu0 %v534
        %600 = vmatprep.subr.bf16.mxu0 %v537
        %601 = vmatpush1.bf16.msra.mxu0 %v536
        %602 = vmatprep.subr.bf16.mxu0 %v539
        %603 = vmatpush1.bf16.msra.mxu0 %v538
        %604 = vmatprep.subr.bf16.mxu0 %v541
        %605 = vmatpush1.bf16.msra.mxu0 %v540
        %606 = vmatprep.subr.bf16.mxu0 %v543
        %607 = vmatpush1.bf16.msra.mxu0 %v542
        %608 = vmatprep.subr.bf16.mxu0 %v545
        %609 = vmatpush1.bf16.msra.mxu0 %v544
        %610 = vmatprep.subr.bf16.mxu0 %v547
        %611 = vmatpush1.bf16.msra.mxu0 %v546
        %612 = vmatprep.subr.bf16.mxu0 %v549
        %613 = vmatpush1.bf16.msra.mxu0 %v548
        %614 = vmatprep.subr.bf16.mxu0 %v551
        %615 = vmatpush1.bf16.msra.mxu0 %v550
        %616 = vmatprep.subr.bf16.mxu0 %v553
        %617 = vmatpush1.bf16.msra.mxu0 %v552
        %618 = vmatprep.subr.bf16.mxu0 %v555
        %619 = vmatpush1.bf16.msra.mxu0 %v554
        %620 = vmatprep.subr.bf16.mxu0 %v557
        %621 = vmatpush1.bf16.msra.mxu0 %v556
        %622 = vmatprep.subr.bf16.mxu0 %v559
        %623 = vmatpush1.bf16.msra.mxu0 %v558
        %624 = vmatprep.subr.bf16.mxu0 %v561
        %625 = vmatpush1.bf16.msra.mxu0 %v560
        %626 = vmatprep.subr.bf16.mxu0 %v563
        %627 = vmatpush1.bf16.msra.mxu0 %v562
        %628 = vmatprep.subr.bf16.mxu0 %v565
        %629 = vmatpush1.bf16.msra.mxu0 %v564
        %630 = vmatprep.mubr.bf16.mxu0 %v363
        %631 = vmatmul.mubr.bf16.gmra.mrb[0].mxu0 %v362
        %v632 = vpop.f32.mrb[0].mxu0
        %v633 = vadd.f32 %v431, %v632
        %v634 = vpop.f32.mrb[0].mxu0
        %v635 = vadd.f32 %v435, %v634
        %v636 = vpop.f32.mrb[0].mxu0
        %v637 = vadd.f32 %v431, %v636
        %v638 = vpop.f32.mrb[0].mxu0
        %v639 = vadd.f32 %v435, %v638
        %640 = vmatprep.mubr.bf16.mxu0 %v365
        %641 = vmatmul.mubr.bf16.gmra.mrb[0].mxu0 %v364
        %v642 = vpop.f32.mrb[0].mxu0
        %v643 = vadd.f32 %v431, %v642
        %v644 = vpop.f32.mrb[0].mxu0
        %v645 = vadd.f32 %v435, %v644
        %v646 = vpop.f32.mrb[0].mxu0
        %v647 = vadd.f32 %v431, %v646
        %v648 = vpop.f32.mrb[0].mxu0
        %v649 = vadd.f32 %v435, %v648
        %650 = vmatprep.mubr.bf16.mxu0 %v367
        %651 = vmatmul.mubr.bf16.gmra.mrb[0].mxu0 %v366
        %v652 = vpop.f32.mrb[0].mxu0
        %v653 = vadd.f32 %v431, %v652
        %v654 = vpop.f32.mrb[0].mxu0
        %v655 = vadd.f32 %v435, %v654
        %v656 = vpop.f32.mrb[0].mxu0
        %v657 = vadd.f32 %v431, %v656
        %v658 = vpop.f32.mrb[0].mxu0
        %v659 = vadd.f32 %v435, %v658
        %660 = vmatprep.mubr.bf16.mxu0 %v369
        %661 = vmatmul.mubr.bf16.gmra.mrb[0].mxu0 %v368
        %v662 = vpop.f32.mrb[0].mxu0
        %v663 = vadd.f32 %v431, %v662
        %v664 = vpop.f32.mrb[0].mxu0
        %v665 = vadd.f32 %v435, %v664
        %v666 = vpop.f32.mrb[0].mxu0
        %v667 = vadd.f32 %v431, %v666
        %v668 = vpop.f32.mrb[0].mxu0
        %v669 = vadd.f32 %v435, %v668
        %670 = vmatprep.mubr.bf16.mxu0 %v371
        %671 = vmatmul.mubr.bf16.gmra.mrb[0].mxu0 %v370
        %v672 = vpop.f32.mrb[0].mxu0
        %v673 = vadd.f32 %v431, %v672
        %v674 = vpop.f32.mrb[0].mxu0
        %v675 = vadd.f32 %v435, %v674
        %v676 = vpop.f32.mrb[0].mxu0
        %v677 = vadd.f32 %v431, %v676
        %v678 = vpop.f32.mrb[0].mxu0
        %v679 = vadd.f32 %v435, %v678
        %680 = vmatprep.mubr.bf16.mxu0 %v373
        %681 = vmatmul.mubr.bf16.gmra.mrb[0].mxu0 %v372
        %v682 = vpop.f32.mrb[0].mxu0
        %v683 = vadd.f32 %v431, %v682
        %v684 = vpop.f32.mrb[0].mxu0
        %v685 = vadd.f32 %v435, %v684
        %v686 = vpop.f32.mrb[0].mxu0
        %v687 = vadd.f32 %v431, %v686
        %v688 = vpop.f32.mrb[0].mxu0
        %v689 = vadd.f32 %v435, %v688
        %690 = vmatprep.mubr.bf16.mxu0 %v375
        %691 = vmatmul.mubr.bf16.gmra.mrb[0].mxu0 %v374
        %v692 = vpop.f32.mrb[0].mxu0
        %v693 = vadd.f32 %v431, %v692
        %v694 = vpop.f32.mrb[0].mxu0
        %v695 = vadd.f32 %v435, %v694
        %v696 = vpop.f32.mrb[0].mxu0
        %v697 = vadd.f32 %v431, %v696
        %v698 = vpop.f32.mrb[0].mxu0
        %v699 = vadd.f32 %v435, %v698
        %700 = vmatprep.mubr.bf16.mxu0 %v377
        %701 = vmatmul.mubr.bf16.gmra.mrb[0].mxu0 %v376
        %v702 = vpop.f32.mrb[0].mxu0
        %v703 = vadd.f32 %v431, %v702
        %v704 = vpop.f32.mrb[0].mxu0
        %v705 = vadd.f32 %v435, %v704
        %v706 = vpop.f32.mrb[0].mxu0
        %v707 = vadd.f32 %v431, %v706
        %v708 = vpop.f32.mrb[0].mxu0
        %v709 = vadd.f32 %v435, %v708
        %710 = vmatprep.mubr.bf16.mxu0 %v379
        %711 = vmatmul.mubr.bf16.gmra.mrb[0].mxu0 %v378
        %v712 = vpop.f32.mrb[0].mxu0
        %v713 = vadd.f32 %v431, %v712
        %v714 = vpop.f32.mrb[0].mxu0
        %v715 = vadd.f32 %v435, %v714
        %v716 = vpop.f32.mrb[0].mxu0
        %v717 = vadd.f32 %v431, %v716
        %v718 = vpop.f32.mrb[0].mxu0
        %v719 = vadd.f32 %v435, %v718
        %720 = vmatprep.mubr.bf16.mxu0 %v381
        %721 = vmatmul.mubr.bf16.gmra.mrb[0].mxu0 %v380
        %v722 = vpop.f32.mrb[0].mxu0
        %v723 = vadd.f32 %v431, %v722
        %v724 = vpop.f32.mrb[0].mxu0
        %v725 = vadd.f32 %v435, %v724
        %v726 = vpop.f32.mrb[0].mxu0
        %v727 = vadd.f32 %v431, %v726
        %v728 = vpop.f32.mrb[0].mxu0
        %v729 = vadd.f32 %v435, %v728
        %730 = vmatprep.mubr.bf16.mxu0 %v383
        %731 = vmatmul.mubr.bf16.gmra.mrb[0].mxu0 %v382
        %v732 = vpop.f32.mrb[0].mxu0
        %v733 = vadd.f32 %v431, %v732
        %v734 = vpop.f32.mrb[0].mxu0
        %v735 = vadd.f32 %v435, %v734
        %v736 = vpop.f32.mrb[0].mxu0
        %v737 = vadd.f32 %v431, %v736
        %v738 = vpop.f32.mrb[0].mxu0
        %v739 = vadd.f32 %v435, %v738
        %740 = vmatprep.mubr.bf16.mxu0 %v385
        %741 = vmatmul.mubr.bf16.gmra.mrb[0].mxu0 %v384
        %v742 = vpop.f32.mrb[0].mxu0
        %v743 = vadd.f32 %v431, %v742
        %v744 = vpop.f32.mrb[0].mxu0
        %v745 = vadd.f32 %v435, %v744
        %v746 = vpop.f32.mrb[0].mxu0
        %v747 = vadd.f32 %v431, %v746
        %v748 = vpop.f32.mrb[0].mxu0
        %v749 = vadd.f32 %v435, %v748
        %750 = vmatprep.mubr.bf16.mxu0 %v387
        %751 = vmatmul.mubr.bf16.gmra.mrb[0].mxu0 %v386
        %v752 = vpop.f32.mrb[0].mxu0
        %v753 = vadd.f32 %v431, %v752
        %v754 = vpop.f32.mrb[0].mxu0
        %v755 = vadd.f32 %v435, %v754
        %v756 = vpop.f32.mrb[0].mxu0
        %v757 = vadd.f32 %v431, %v756
        %v758 = vpop.f32.mrb[0].mxu0
        %v759 = vadd.f32 %v435, %v758
        %760 = vmatprep.mubr.bf16.mxu0 %v389
        %761 = vmatmul.mubr.bf16.gmra.mrb[0].mxu0 %v388
        %v762 = vpop.f32.mrb[0].mxu0
        %v763 = vadd.f32 %v431, %v762
        %v764 = vpop.f32.mrb[0].mxu0
        %v765 = vadd.f32 %v435, %v764
        %v766 = vpop.f32.mrb[0].mxu0
        %v767 = vadd.f32 %v431, %v766
        %v768 = vpop.f32.mrb[0].mxu0
        %v769 = vadd.f32 %v435, %v768
        %770 = vmatprep.mubr.bf16.mxu0 %v391
        %771 = vmatmul.mubr.bf16.gmra.mrb[0].mxu0 %v390
        %v772 = vpop.f32.mrb[0].mxu0
        %v773 = vadd.f32 %v431, %v772
        %v774 = vpop.f32.mrb[0].mxu0
        %v775 = vadd.f32 %v435, %v774
        %v776 = vpop.f32.mrb[0].mxu0
        %v777 = vadd.f32 %v431, %v776
        %v778 = vpop.f32.mrb[0].mxu0
        %v779 = vadd.f32 %v435, %v778
        %780 = vmatprep.mubr.bf16.mxu0 %v393
        %781 = vmatmul.mubr.bf16.gmra.mrb[0].mxu0 %v392
        %v782 = vpop.f32.mrb[0].mxu0
        %v783 = vadd.f32 %v431, %v782
        %v784 = vpop.f32.mrb[0].mxu0
        %v785 = vadd.f32 %v435, %v784
        %v786 = vpop.f32.mrb[0].mxu0
        %v787 = vadd.f32 %v431, %v786
        %v788 = vpop.f32.mrb[0].mxu0
        %v789 = vadd.f32 %v435, %v788
        %790 = vdwg.mxu0
        %791 = vst [vmem:[#allocation2] sm:$0xff] 0.0
        %792 = vst [vmem:[#allocation2 + $0x8] sm:$0xff] 0.0
        %793 = vst [vmem:[#allocation2 + $0x10] sm:$0x3] 0.0
        %s794 = scalar_lea.vmem [#allocation2], 408
        %795 = vst [vmem:[%s794] sm:$0xff] 0.0
        %796 = vst [vmem:[%s794 + $0x8] sm:$0xff] 0.0
        %797 = vst [vmem:[%s794 + $0x10] sm:$0x3] 0.0
        %798 = vst [vmem:[#allocation2] sm:$0x1] 0.0
        %799 = vst [vmem:[#allocation2 + $0x18] sm:$0x1] 0.0
        %800 = vst [vmem:[#allocation2 + $0x30] sm:$0x1] 0.0
        %801 = vst [vmem:[#allocation2 + $0x48] sm:$0x1] 0.0
        %802 = vst [vmem:[#allocation2 + $0x60] sm:$0x1] 0.0
        %803 = vst [vmem:[#allocation2 + $0x78] sm:$0x1] 0.0
        %804 = vst [vmem:[#allocation2 + $0x90] sm:$0x1] 0.0
        %805 = vst [vmem:[#allocation2 + $0xa8] sm:$0x1] 0.0
        %806 = vst [vmem:[#allocation2 + $0xc0] sm:$0x1] 0.0
        %807 = vst [vmem:[#allocation2 + $0xd8] sm:$0x1] 0.0
        %808 = vst [vmem:[#allocation2 + $0xf0] sm:$0x1] 0.0
        %809 = vst [vmem:[#allocation2 + $0x108] sm:$0x1] 0.0
        %810 = vst [vmem:[#allocation2 + $0x120] sm:$0x1] 0.0
        %811 = vst [vmem:[#allocation2 + $0x138] sm:$0x1] 0.0
        %812 = vst [vmem:[#allocation2 + $0x150] sm:$0x1] 0.0
        %813 = vst [vmem:[#allocation2 + $0x168] sm:$0x1] 0.0
        %814 = vst [vmem:[#allocation2 + $0x180] sm:$0x1] 0.0
        %815 = vst [vmem:[#allocation2 + $0x198] sm:$0x1] 0.0
        %816 = vst [vmem:[#allocation2 + $0x11] sm:$0x1] 0.0
        %817 = vst [vmem:[#allocation2 + $0x29] sm:$0x1] 0.0
        %818 = vst [vmem:[#allocation2 + $0x41] sm:$0x1] 0.0
        %819 = vst [vmem:[#allocation2 + $0x59] sm:$0x1] 0.0
        %820 = vst [vmem:[#allocation2 + $0x71] sm:$0x1] 0.0
        %821 = vst [vmem:[#allocation2 + $0x89] sm:$0x1] 0.0
        %822 = vst [vmem:[#allocation2 + $0xa1] sm:$0x1] 0.0
        %823 = vst [vmem:[#allocation2 + $0xb9] sm:$0x1] 0.0
        %824 = vst [vmem:[#allocation2 + $0xd1] sm:$0x1] 0.0
        %825 = vst [vmem:[#allocation2 + $0xe9] sm:$0x1] 0.0
        %826 = vst [vmem:[#allocation2 + $0x101] sm:$0x1] 0.0
        %827 = vst [vmem:[#allocation2 + $0x119] sm:$0x1] 0.0
        %828 = vst [vmem:[#allocation2 + $0x131] sm:$0x1] 0.0
        %829 = vst [vmem:[#allocation2 + $0x149] sm:$0x1] 0.0
        %830 = vst [vmem:[#allocation2 + $0x161] sm:$0x1] 0.0
        %831 = vst [vmem:[#allocation2 + $0x179] sm:$0x1] 0.0
        %832 = vst [vmem:[#allocation2 + $0x191] sm:$0x1] 0.0
        %833 = vst [vmem:[#allocation2 + $0x1a9] sm:$0x1] 0.0
        %s834 = scalar_lea.vmem [#allocation2], 24
        %835 = vst [vmem:[%s834 + $0x1] sm:$0xff] %v633
        %836 = vst [vmem:[%s834 + $0x9] sm:$0xff] %v637
        %837 = vst [vmem:[%s834 + $0x19] sm:$0xff] %v643
        %838 = vst [vmem:[%s834 + $0x21] sm:$0xff] %v647
        %839 = vst [vmem:[%s834 + $0x31] sm:$0xff] %v653
        %840 = vst [vmem:[%s834 + $0x39] sm:$0xff] %v657
        %841 = vst [vmem:[%s834 + $0x49] sm:$0xff] %v663
        %842 = vst [vmem:[%s834 + $0x51] sm:$0xff] %v667
        %843 = vst [vmem:[%s834 + $0x61] sm:$0xff] %v673
        %844 = vst [vmem:[%s834 + $0x69] sm:$0xff] %v677
        %845 = vst [vmem:[%s834 + $0x79] sm:$0xff] %v683
        %846 = vst [vmem:[%s834 + $0x81] sm:$0xff] %v687
        %847 = vst [vmem:[%s834 + $0x91] sm:$0xff] %v693
        %848 = vst [vmem:[%s834 + $0x99] sm:$0xff] %v697
        %849 = vst [vmem:[%s834 + $0xa9] sm:$0xff] %v703
        %850 = vst [vmem:[%s834 + $0xb1] sm:$0xff] %v707
        %851 = vst [vmem:[%s834 + $0xc1] sm:$0xff] %v713
        %852 = vst [vmem:[%s834 + $0xc9] sm:$0xff] %v717
        %853 = vst [vmem:[%s834 + $0xd9] sm:$0xff] %v723
        %854 = vst [vmem:[%s834 + $0xe1] sm:$0xff] %v727
        %855 = vst [vmem:[%s834 + $0xf1] sm:$0xff] %v733
        %856 = vst [vmem:[%s834 + $0xf9] sm:$0xff] %v737
        %857 = vst [vmem:[%s834 + $0x109] sm:$0xff] %v743
        %858 = vst [vmem:[%s834 + $0x111] sm:$0xff] %v747
        %859 = vst [vmem:[%s834 + $0x121] sm:$0xff] %v753
        %860 = vst [vmem:[%s834 + $0x129] sm:$0xff] %v757
        %861 = vst [vmem:[%s834 + $0x139] sm:$0xff] %v763
        %862 = vst [vmem:[%s834 + $0x141] sm:$0xff] %v767
        %863 = vst [vmem:[%s834 + $0x151] sm:$0xff] %v773
        %864 = vst [vmem:[%s834 + $0x159] sm:$0xff] %v777
        %865 = vst [vmem:[%s834 + $0x169] sm:$0xff] %v783
        %866 = vst [vmem:[%s834 + $0x171] sm:$0xff] %v787
        %v867 = vld [vmem:[%s3] sm:$0xff]
        %v868 = vld [vmem:[%s3 + $0x8] sm:$0x1]
        %v869 = vld [vmem:[#allocation2] sm:$0xff]
        %v870 = vld [vmem:[#allocation2 + $0x8] sm:$0xff]
        %v871 = vld [vmem:[#allocation2 + $0x18] sm:$0xff]
        %v872 = vld [vmem:[#allocation2 + $0x20] sm:$0xff]
        %v873 = vld [vmem:[#allocation2 + $0x30] sm:$0xff]
        %v874 = vld [vmem:[#allocation2 + $0x38] sm:$0xff]
        %v875 = vld [vmem:[#allocation2 + $0x48] sm:$0xff]
        %v876 = vld [vmem:[#allocation2 + $0x50] sm:$0xff]
        %v877 = vld [vmem:[#allocation2 + $0x60] sm:$0xff]
        %v878 = vld [vmem:[#allocation2 + $0x68] sm:$0xff]
        %v879 = vld [vmem:[#allocation2 + $0x78] sm:$0xff]
        %v880 = vld [vmem:[#allocation2 + $0x80] sm:$0xff]
        %v881 = vld [vmem:[#allocation2 + $0x90] sm:$0xff]
        %v882 = vld [vmem:[#allocation2 + $0x98] sm:$0xff]
        %v883 = vld [vmem:[#allocation2 + $0xa8] sm:$0xff]
        %v884 = vld [vmem:[#allocation2 + $0xb0] sm:$0xff]
        %v885 = vld [vmem:[#allocation2 + $0xc0] sm:$0xff]
        %v886 = vld [vmem:[#allocation2 + $0xc8] sm:$0xff]
        %v887 = vld [vmem:[#allocation2 + $0xd8] sm:$0xff]
        %v888 = vld [vmem:[#allocation2 + $0xe0] sm:$0xff]
        %v889 = vld [vmem:[#allocation2 + $0xf0] sm:$0xff]
        %v890 = vld [vmem:[#allocation2 + $0xf8] sm:$0xff]
        %v891 = vld [vmem:[#allocation2 + $0x108] sm:$0xff]
        %v892 = vld [vmem:[#allocation2 + $0x110] sm:$0xff]
        %v893 = vld [vmem:[#allocation2 + $0x120] sm:$0xff]
        %v894 = vld [vmem:[#allocation2 + $0x128] sm:$0xff]
        %v895 = vld [vmem:[#allocation2 + $0x138] sm:$0xff]
        %v896 = vld [vmem:[#allocation2 + $0x140] sm:$0xff]
        %v897 = vld [vmem:[#allocation2 + $0x150] sm:$0xff]
        %v898 = vld [vmem:[#allocation2 + $0x158] sm:$0xff]
        %v899 = vld [vmem:[#allocation2 + $0x168] sm:$0xff]
        %v900 = vld [vmem:[#allocation2 + $0x170] sm:$0xff]
        %v901 = vlaneseq
        %v902 = vshrl.u32 %v901, 7
        %v903 = vsub.s32 0, %v902
        %v904 = vrot.slane %v867, %v903
        %v905 = vmul.f32 %v869, %v904
        %v906 = vmul.f32 %v870, %v904
        %v907 = vmul.f32 %v871, %v904
        %v908 = vmul.f32 %v872, %v904
        %v909 = vmul.f32 %v873, %v904
        %v910 = vmul.f32 %v874, %v904
        %v911 = vmul.f32 %v875, %v904
        %v912 = vmul.f32 %v876, %v904
        %v913 = vmul.f32 %v877, %v904
        %v914 = vmul.f32 %v878, %v904
        %v915 = vmul.f32 %v879, %v904
        %v916 = vmul.f32 %v880, %v904
        %v917 = vmul.f32 %v881, %v904
        %v918 = vmul.f32 %v882, %v904
        %v919 = vmul.f32 %v883, %v904
        %v920 = vmul.f32 %v884, %v904
        %v921 = vmul.f32 %v885, %v904
        %v922 = vmul.f32 %v886, %v904
        %v923 = vmul.f32 %v887, %v904
        %v924 = vmul.f32 %v888, %v904
        %v925 = vmul.f32 %v889, %v904
        %v926 = vmul.f32 %v890, %v904
        %v927 = vmul.f32 %v891, %v904
        %v928 = vmul.f32 %v892, %v904
        %v929 = vmul.f32 %v893, %v904
        %v930 = vmul.f32 %v894, %v904
        %v931 = vmul.f32 %v895, %v904
        %v932 = vmul.f32 %v896, %v904
        %v933 = vmul.f32 %v897, %v904
        %v934 = vmul.f32 %v898, %v904
        %v935 = vmul.f32 %v899, %v904
        %v936 = vmul.f32 %v900, %v904
        %v937 = vadd.f32 %v905, 0.0
        %v938 = vadd.f32 %v906, 0.0
        %v939 = vadd.f32 %v907, 0.0
        %v940 = vadd.f32 %v908, 0.0
        %v941 = vadd.f32 %v909, 0.0
        %v942 = vadd.f32 %v910, 0.0
        %v943 = vadd.f32 %v911, 0.0
        %v944 = vadd.f32 %v912, 0.0
        %v945 = vadd.f32 %v913, 0.0
        %v946 = vadd.f32 %v914, 0.0
        %v947 = vadd.f32 %v915, 0.0
        %v948 = vadd.f32 %v916, 0.0
        %v949 = vadd.f32 %v917, 0.0
        %v950 = vadd.f32 %v918, 0.0
        %v951 = vadd.f32 %v919, 0.0
        %v952 = vadd.f32 %v920, 0.0
        %v953 = vadd.f32 %v921, 0.0
        %v954 = vadd.f32 %v922, 0.0
        %v955 = vadd.f32 %v923, 0.0
        %v956 = vadd.f32 %v924, 0.0
        %v957 = vadd.f32 %v925, 0.0
        %v958 = vadd.f32 %v926, 0.0
        %v959 = vadd.f32 %v927, 0.0
        %v960 = vadd.f32 %v928, 0.0
        %v961 = vadd.f32 %v929, 0.0
        %v962 = vadd.f32 %v930, 0.0
        %v963 = vadd.f32 %v931, 0.0
        %v964 = vadd.f32 %v932, 0.0
        %v965 = vadd.f32 %v933, 0.0
        %v966 = vadd.f32 %v934, 0.0
        %v967 = vadd.f32 %v935, 0.0
        %v968 = vadd.f32 %v936, 0.0
        %v969 = vld [vmem:[#allocation2 + $0x1] sm:$0xff]
        %v970 = vld [vmem:[#allocation2 + $0x9] sm:$0xff]
        %v971 = vld [vmem:[#allocation2 + $0x19] sm:$0xff]
        %v972 = vld [vmem:[#allocation2 + $0x21] sm:$0xff]
        %v973 = vld [vmem:[#allocation2 + $0x31] sm:$0xff]
        %v974 = vld [vmem:[#allocation2 + $0x39] sm:$0xff]
        %v975 = vld [vmem:[#allocation2 + $0x49] sm:$0xff]
        %v976 = vld [vmem:[#allocation2 + $0x51] sm:$0xff]
        %v977 = vld [vmem:[#allocation2 + $0x61] sm:$0xff]
        %v978 = vld [vmem:[#allocation2 + $0x69] sm:$0xff]
        %v979 = vld [vmem:[#allocation2 + $0x79] sm:$0xff]
        %v980 = vld [vmem:[#allocation2 + $0x81] sm:$0xff]
        %v981 = vld [vmem:[#allocation2 + $0x91] sm:$0xff]
        %v982 = vld [vmem:[#allocation2 + $0x99] sm:$0xff]
        %v983 = vld [vmem:[#allocation2 + $0xa9] sm:$0xff]
        %v984 = vld [vmem:[#allocation2 + $0xb1] sm:$0xff]
        %v985 = vld [vmem:[#allocation2 + $0xc1] sm:$0xff]
        %v986 = vld [vmem:[#allocation2 + $0xc9] sm:$0xff]
        %v987 = vld [vmem:[#allocation2 + $0xd9] sm:$0xff]
        %v988 = vld [vmem:[#allocation2 + $0xe1] sm:$0xff]
        %v989 = vld [vmem:[#allocation2 + $0xf1] sm:$0xff]
        %v990 = vld [vmem:[#allocation2 + $0xf9] sm:$0xff]
        %v991 = vld [vmem:[#allocation2 + $0x109] sm:$0xff]
        %v992 = vld [vmem:[#allocation2 + $0x111] sm:$0xff]
        %v993 = vld [vmem:[#allocation2 + $0x121] sm:$0xff]
        %v994 = vld [vmem:[#allocation2 + $0x129] sm:$0xff]
        %v995 = vld [vmem:[#allocation2 + $0x139] sm:$0xff]
        %v996 = vld [vmem:[#allocation2 + $0x141] sm:$0xff]
        %v997 = vld [vmem:[#allocation2 + $0x151] sm:$0xff]
        %v998 = vld [vmem:[#allocation2 + $0x159] sm:$0xff]
        %v999 = vld [vmem:[#allocation2 + $0x169] sm:$0xff]
        %v1000 = vld [vmem:[#allocation2 + $0x171] sm:$0xff]
        %v1001 = vlaneseq
        %v1002 = vshrl.u32 %v1001, 7
        %v1003 = vsub.s32 1, %v1002
        %v1004 = vrot.slane %v867, %v1003
        %v1005 = vmul.f32 %v969, %v1004
        %v1006 = vmul.f32 %v970, %v1004
        %v1007 = vmul.f32 %v971, %v1004
        %v1008 = vmul.f32 %v972, %v1004
        %v1009 = vmul.f32 %v973, %v1004
        %v1010 = vmul.f32 %v974, %v1004
        %v1011 = vmul.f32 %v975, %v1004
        %v1012 = vmul.f32 %v976, %v1004
        %v1013 = vmul.f32 %v977, %v1004
        %v1014 = vmul.f32 %v978, %v1004
        %v1015 = vmul.f32 %v979, %v1004
        %v1016 = vmul.f32 %v980, %v1004
        %v1017 = vmul.f32 %v981, %v1004
        %v1018 = vmul.f32 %v982, %v1004
        %v1019 = vmul.f32 %v983, %v1004
        %v1020 = vmul.f32 %v984, %v1004
        %v1021 = vmul.f32 %v985, %v1004
        %v1022 = vmul.f32 %v986, %v1004
        %v1023 = vmul.f32 %v987, %v1004
        %v1024 = vmul.f32 %v988, %v1004
        %v1025 = vmul.f32 %v989, %v1004
        %v1026 = vmul.f32 %v990, %v1004
        %v1027 = vmul.f32 %v991, %v1004
        %v1028 = vmul.f32 %v992, %v1004
        %v1029 = vmul.f32 %v993, %v1004
        %v1030 = vmul.f32 %v994, %v1004
        %v1031 = vmul.f32 %v995, %v1004
        %v1032 = vmul.f32 %v996, %v1004
        %v1033 = vmul.f32 %v997, %v1004
        %v1034 = vmul.f32 %v998, %v1004
        %v1035 = vmul.f32 %v999, %v1004
        %v1036 = vmul.f32 %v1000, %v1004
        %v1037 = vadd.f32 %v937, %v1005
        %v1038 = vadd.f32 %v938, %v1006
        %v1039 = vadd.f32 %v939, %v1007
        %v1040 = vadd.f32 %v940, %v1008
        %v1041 = vadd.f32 %v941, %v1009
        %v1042 = vadd.f32 %v942, %v1010
        %v1043 = vadd.f32 %v943, %v1011
        %v1044 = vadd.f32 %v944, %v1012
        %v1045 = vadd.f32 %v945, %v1013
        %v1046 = vadd.f32 %v946, %v1014
        %v1047 = vadd.f32 %v947, %v1015
        %v1048 = vadd.f32 %v948, %v1016
        %v1049 = vadd.f32 %v949, %v1017
        %v1050 = vadd.f32 %v950, %v1018
        %v1051 = vadd.f32 %v951, %v1019
        %v1052 = vadd.f32 %v952, %v1020
        %v1053 = vadd.f32 %v953, %v1021
        %v1054 = vadd.f32 %v954, %v1022
        %v1055 = vadd.f32 %v955, %v1023
        %v1056 = vadd.f32 %v956, %v1024
        %v1057 = vadd.f32 %v957, %v1025
        %v1058 = vadd.f32 %v958, %v1026
        %v1059 = vadd.f32 %v959, %v1027
        %v1060 = vadd.f32 %v960, %v1028
        %v1061 = vadd.f32 %v961, %v1029
        %v1062 = vadd.f32 %v962, %v1030
        %v1063 = vadd.f32 %v963, %v1031
        %v1064 = vadd.f32 %v964, %v1032
        %v1065 = vadd.f32 %v965, %v1033
        %v1066 = vadd.f32 %v966, %v1034
        %v1067 = vadd.f32 %v967, %v1035
        %v1068 = vadd.f32 %v968, %v1036
        %v1069 = vld [vmem:[#allocation2 + $0x2] sm:$0xff]
        %v1070 = vld [vmem:[#allocation2 + $0xa] sm:$0xff]
        %v1071 = vld [vmem:[#allocation2 + $0x1a] sm:$0xff]
        %v1072 = vld [vmem:[#allocation2 + $0x22] sm:$0xff]
        %v1073 = vld [vmem:[#allocation2 + $0x32] sm:$0xff]
        %v1074 = vld [vmem:[#allocation2 + $0x3a] sm:$0xff]
        %v1075 = vld [vmem:[#allocation2 + $0x4a] sm:$0xff]
        %v1076 = vld [vmem:[#allocation2 + $0x52] sm:$0xff]
        %v1077 = vld [vmem:[#allocation2 + $0x62] sm:$0xff]
        %v1078 = vld [vmem:[#allocation2 + $0x6a] sm:$0xff]
        %v1079 = vld [vmem:[#allocation2 + $0x7a] sm:$0xff]
        %v1080 = vld [vmem:[#allocation2 + $0x82] sm:$0xff]
        %v1081 = vld [vmem:[#allocation2 + $0x92] sm:$0xff]
        %v1082 = vld [vmem:[#allocation2 + $0x9a] sm:$0xff]
        %v1083 = vld [vmem:[#allocation2 + $0xaa] sm:$0xff]
        %v1084 = vld [vmem:[#allocation2 + $0xb2] sm:$0xff]
        %v1085 = vld [vmem:[#allocation2 + $0xc2] sm:$0xff]
        %v1086 = vld [vmem:[#allocation2 + $0xca] sm:$0xff]
        %v1087 = vld [vmem:[#allocation2 + $0xda] sm:$0xff]
        %v1088 = vld [vmem:[#allocation2 + $0xe2] sm:$0xff]
        %v1089 = vld [vmem:[#allocation2 + $0xf2] sm:$0xff]
        %v1090 = vld [vmem:[#allocation2 + $0xfa] sm:$0xff]
        %v1091 = vld [vmem:[#allocation2 + $0x10a] sm:$0xff]
        %v1092 = vld [vmem:[#allocation2 + $0x112] sm:$0xff]
        %v1093 = vld [vmem:[#allocation2 + $0x122] sm:$0xff]
        %v1094 = vld [vmem:[#allocation2 + $0x12a] sm:$0xff]
        %v1095 = vld [vmem:[#allocation2 + $0x13a] sm:$0xff]
        %v1096 = vld [vmem:[#allocation2 + $0x142] sm:$0xff]
        %v1097 = vld [vmem:[#allocation2 + $0x152] sm:$0xff]
        %v1098 = vld [vmem:[#allocation2 + $0x15a] sm:$0xff]
        %v1099 = vld [vmem:[#allocation2 + $0x16a] sm:$0xff]
        %v1100 = vld [vmem:[#allocation2 + $0x172] sm:$0xff]
        %v1101 = vlaneseq
        %v1102 = vshrl.u32 %v1101, 7
        %v1103 = vsub.s32 2, %v1102
        %v1104 = vrot.slane %v867, %v1103
        %v1105 = vmul.f32 %v1069, %v1104
        %v1106 = vmul.f32 %v1070, %v1104
        %v1107 = vmul.f32 %v1071, %v1104
        %v1108 = vmul.f32 %v1072, %v1104
        %v1109 = vmul.f32 %v1073, %v1104
        %v1110 = vmul.f32 %v1074, %v1104
        %v1111 = vmul.f32 %v1075, %v1104
        %v1112 = vmul.f32 %v1076, %v1104
        %v1113 = vmul.f32 %v1077, %v1104
        %v1114 = vmul.f32 %v1078, %v1104
        %v1115 = vmul.f32 %v1079, %v1104
        %v1116 = vmul.f32 %v1080, %v1104
        %v1117 = vmul.f32 %v1081, %v1104
        %v1118 = vmul.f32 %v1082, %v1104
        %v1119 = vmul.f32 %v1083, %v1104
        %v1120 = vmul.f32 %v1084, %v1104
        %v1121 = vmul.f32 %v1085, %v1104
        %v1122 = vmul.f32 %v1086, %v1104
        %v1123 = vmul.f32 %v1087, %v1104
        %v1124 = vmul.f32 %v1088, %v1104
        %v1125 = vmul.f32 %v1089, %v1104
        %v1126 = vmul.f32 %v1090, %v1104
        %v1127 = vmul.f32 %v1091, %v1104
        %v1128 = vmul.f32 %v1092, %v1104
        %v1129 = vmul.f32 %v1093, %v1104
        %v1130 = vmul.f32 %v1094, %v1104
        %v1131 = vmul.f32 %v1095, %v1104
        %v1132 = vmul.f32 %v1096, %v1104
        %v1133 = vmul.f32 %v1097, %v1104
        %v1134 = vmul.f32 %v1098, %v1104
        %v1135 = vmul.f32 %v1099, %v1104
        %v1136 = vmul.f32 %v1100, %v1104
        %v1137 = vadd.f32 %v1037, %v1105
        %v1138 = vadd.f32 %v1038, %v1106
        %v1139 = vadd.f32 %v1039, %v1107
        %v1140 = vadd.f32 %v1040, %v1108
        %v1141 = vadd.f32 %v1041, %v1109
        %v1142 = vadd.f32 %v1042, %v1110
        %v1143 = vadd.f32 %v1043, %v1111
        %v1144 = vadd.f32 %v1044, %v1112
        %v1145 = vadd.f32 %v1045, %v1113
        %v1146 = vadd.f32 %v1046, %v1114
        %v1147 = vadd.f32 %v1047, %v1115
        %v1148 = vadd.f32 %v1048, %v1116
        %v1149 = vadd.f32 %v1049, %v1117
        %v1150 = vadd.f32 %v1050, %v1118
        %v1151 = vadd.f32 %v1051, %v1119
        %v1152 = vadd.f32 %v1052, %v1120
        %v1153 = vadd.f32 %v1053, %v1121
        %v1154 = vadd.f32 %v1054, %v1122
        %v1155 = vadd.f32 %v1055, %v1123
        %v1156 = vadd.f32 %v1056, %v1124
        %v1157 = vadd.f32 %v1057, %v1125
        %v1158 = vadd.f32 %v1058, %v1126
        %v1159 = vadd.f32 %v1059, %v1127
        %v1160 = vadd.f32 %v1060, %v1128
        %v1161 = vadd.f32 %v1061, %v1129
        %v1162 = vadd.f32 %v1062, %v1130
        %v1163 = vadd.f32 %v1063, %v1131
        %v1164 = vadd.f32 %v1064, %v1132
        %v1165 = vadd.f32 %v1065, %v1133
        %v1166 = vadd.f32 %v1066, %v1134
        %v1167 = vadd.f32 %v1067, %v1135
        %v1168 = vadd.f32 %v1068, %v1136
        %v1169 = vld [vmem:[%s834] sm:$0xff]
        %v1170 = vld [vmem:[%s834 + $0x8] sm:$0xff]
        %v1171 = vld [vmem:[%s834 + $0x18] sm:$0xff]
        %v1172 = vld [vmem:[%s834 + $0x20] sm:$0xff]
        %v1173 = vld [vmem:[%s834 + $0x30] sm:$0xff]
        %v1174 = vld [vmem:[%s834 + $0x38] sm:$0xff]
        %v1175 = vld [vmem:[%s834 + $0x48] sm:$0xff]
        %v1176 = vld [vmem:[%s834 + $0x50] sm:$0xff]
        %v1177 = vld [vmem:[%s834 + $0x60] sm:$0xff]
        %v1178 = vld [vmem:[%s834 + $0x68] sm:$0xff]
        %v1179 = vld [vmem:[%s834 + $0x78] sm:$0xff]
        %v1180 = vld [vmem:[%s834 + $0x80] sm:$0xff]
        %v1181 = vld [vmem:[%s834 + $0x90] sm:$0xff]
        %v1182 = vld [vmem:[%s834 + $0x98] sm:$0xff]
        %v1183 = vld [vmem:[%s834 + $0xa8] sm:$0xff]
        %v1184 = vld [vmem:[%s834 + $0xb0] sm:$0xff]
        %v1185 = vld [vmem:[%s834 + $0xc0] sm:$0xff]
        %v1186 = vld [vmem:[%s834 + $0xc8] sm:$0xff]
        %v1187 = vld [vmem:[%s834 + $0xd8] sm:$0xff]
        %v1188 = vld [vmem:[%s834 + $0xe0] sm:$0xff]
        %v1189 = vld [vmem:[%s834 + $0xf0] sm:$0xff]
        %v1190 = vld [vmem:[%s834 + $0xf8] sm:$0xff]
        %v1191 = vld [vmem:[%s834 + $0x108] sm:$0xff]
        %v1192 = vld [vmem:[%s834 + $0x110] sm:$0xff]
        %v1193 = vld [vmem:[%s834 + $0x120] sm:$0xff]
        %v1194 = vld [vmem:[%s834 + $0x128] sm:$0xff]
        %v1195 = vld [vmem:[%s834 + $0x138] sm:$0xff]
        %v1196 = vld [vmem:[%s834 + $0x140] sm:$0xff]
        %v1197 = vld [vmem:[%s834 + $0x150] sm:$0xff]
        %v1198 = vld [vmem:[%s834 + $0x158] sm:$0xff]
        %v1199 = vld [vmem:[%s834 + $0x168] sm:$0xff]
        %v1200 = vld [vmem:[%s834 + $0x170] sm:$0xff]
        %v1201 = vlaneseq
        %v1202 = vshrl.u32 %v1201, 7
        %v1203 = vsub.s32 3, %v1202
        %v1204 = vrot.slane %v867, %v1203
        %v1205 = vmul.f32 %v1169, %v1204
        %v1206 = vmul.f32 %v1170, %v1204
        %v1207 = vmul.f32 %v1171, %v1204
        %v1208 = vmul.f32 %v1172, %v1204
        %v1209 = vmul.f32 %v1173, %v1204
        %v1210 = vmul.f32 %v1174, %v1204
        %v1211 = vmul.f32 %v1175, %v1204
        %v1212 = vmul.f32 %v1176, %v1204
        %v1213 = vmul.f32 %v1177, %v1204
        %v1214 = vmul.f32 %v1178, %v1204
        %v1215 = vmul.f32 %v1179, %v1204
        %v1216 = vmul.f32 %v1180, %v1204
        %v1217 = vmul.f32 %v1181, %v1204
        %v1218 = vmul.f32 %v1182, %v1204
        %v1219 = vmul.f32 %v1183, %v1204
        %v1220 = vmul.f32 %v1184, %v1204
        %v1221 = vmul.f32 %v1185, %v1204
        %v1222 = vmul.f32 %v1186, %v1204
        %v1223 = vmul.f32 %v1187, %v1204
        %v1224 = vmul.f32 %v1188, %v1204
        %v1225 = vmul.f32 %v1189, %v1204
        %v1226 = vmul.f32 %v1190, %v1204
        %v1227 = vmul.f32 %v1191, %v1204
        %v1228 = vmul.f32 %v1192, %v1204
        %v1229 = vmul.f32 %v1193, %v1204
        %v1230 = vmul.f32 %v1194, %v1204
        %v1231 = vmul.f32 %v1195, %v1204
        %v1232 = vmul.f32 %v1196, %v1204
        %v1233 = vmul.f32 %v1197, %v1204
        %v1234 = vmul.f32 %v1198, %v1204
        %v1235 = vmul.f32 %v1199, %v1204
        %v1236 = vmul.f32 %v1200, %v1204
        %v1237 = vadd.f32 %v1137, %v1205
        %v1238 = vadd.f32 %v1138, %v1206
        %v1239 = vadd.f32 %v1139, %v1207
        %v1240 = vadd.f32 %v1140, %v1208
        %v1241 = vadd.f32 %v1141, %v1209
        %v1242 = vadd.f32 %v1142, %v1210
        %v1243 = vadd.f32 %v1143, %v1211
        %v1244 = vadd.f32 %v1144, %v1212
        %v1245 = vadd.f32 %v1145, %v1213
        %v1246 = vadd.f32 %v1146, %v1214
        %v1247 = vadd.f32 %v1147, %v1215
        %v1248 = vadd.f32 %v1148, %v1216
        %v1249 = vadd.f32 %v1149, %v1217
        %v1250 = vadd.f32 %v1150, %v1218
        %v1251 = vadd.f32 %v1151, %v1219
        %v1252 = vadd.f32 %v1152, %v1220
        %v1253 = vadd.f32 %v1153, %v1221
        %v1254 = vadd.f32 %v1154, %v1222
        %v1255 = vadd.f32 %v1155, %v1223
        %v1256 = vadd.f32 %v1156, %v1224
        %v1257 = vadd.f32 %v1157, %v1225
        %v1258 = vadd.f32 %v1158, %v1226
        %v1259 = vadd.f32 %v1159, %v1227
        %v1260 = vadd.f32 %v1160, %v1228
        %v1261 = vadd.f32 %v1161, %v1229
        %v1262 = vadd.f32 %v1162, %v1230
        %v1263 = vadd.f32 %v1163, %v1231
        %v1264 = vadd.f32 %v1164, %v1232
        %v1265 = vadd.f32 %v1165, %v1233
        %v1266 = vadd.f32 %v1166, %v1234
        %v1267 = vadd.f32 %v1167, %v1235
        %v1268 = vadd.f32 %v1168, %v1236
        %v1269 = vld [vmem:[%s834 + $0x1] sm:$0xff]
        %v1270 = vld [vmem:[%s834 + $0x9] sm:$0xff]
        %v1271 = vld [vmem:[%s834 + $0x19] sm:$0xff]
        %v1272 = vld [vmem:[%s834 + $0x21] sm:$0xff]
        %v1273 = vld [vmem:[%s834 + $0x31] sm:$0xff]
        %v1274 = vld [vmem:[%s834 + $0x39] sm:$0xff]
        %v1275 = vld [vmem:[%s834 + $0x49] sm:$0xff]
        %v1276 = vld [vmem:[%s834 + $0x51] sm:$0xff]
        %v1277 = vld [vmem:[%s834 + $0x61] sm:$0xff]
        %v1278 = vld [vmem:[%s834 + $0x69] sm:$0xff]
        %v1279 = vld [vmem:[%s834 + $0x79] sm:$0xff]
        %v1280 = vld [vmem:[%s834 + $0x81] sm:$0xff]
        %v1281 = vld [vmem:[%s834 + $0x91] sm:$0xff]
        %v1282 = vld [vmem:[%s834 + $0x99] sm:$0xff]
        %v1283 = vld [vmem:[%s834 + $0xa9] sm:$0xff]
        %v1284 = vld [vmem:[%s834 + $0xb1] sm:$0xff]
        %v1285 = vld [vmem:[%s834 + $0xc1] sm:$0xff]
        %v1286 = vld [vmem:[%s834 + $0xc9] sm:$0xff]
        %v1287 = vld [vmem:[%s834 + $0xd9] sm:$0xff]
        %v1288 = vld [vmem:[%s834 + $0xe1] sm:$0xff]
        %v1289 = vld [vmem:[%s834 + $0xf1] sm:$0xff]
        %v1290 = vld [vmem:[%s834 + $0xf9] sm:$0xff]
        %v1291 = vld [vmem:[%s834 + $0x109] sm:$0xff]
        %v1292 = vld [vmem:[%s834 + $0x111] sm:$0xff]
        %v1293 = vld [vmem:[%s834 + $0x121] sm:$0xff]
        %v1294 = vld [vmem:[%s834 + $0x129] sm:$0xff]
        %v1295 = vld [vmem:[%s834 + $0x139] sm:$0xff]
        %v1296 = vld [vmem:[%s834 + $0x141] sm:$0xff]
        %v1297 = vld [vmem:[%s834 + $0x151] sm:$0xff]
        %v1298 = vld [vmem:[%s834 + $0x159] sm:$0xff]
        %v1299 = vld [vmem:[%s834 + $0x169] sm:$0xff]
        %v1300 = vld [vmem:[%s834 + $0x171] sm:$0xff]
        %v1301 = vlaneseq
        %v1302 = vshrl.u32 %v1301, 7
        %v1303 = vsub.s32 4, %v1302
        %v1304 = vrot.slane %v867, %v1303
        %v1305 = vmul.f32 %v1269, %v1304
        %v1306 = vmul.f32 %v1270, %v1304
        %v1307 = vmul.f32 %v1271, %v1304
        %v1308 = vmul.f32 %v1272, %v1304
        %v1309 = vmul.f32 %v1273, %v1304
        %v1310 = vmul.f32 %v1274, %v1304
        %v1311 = vmul.f32 %v1275, %v1304
        %v1312 = vmul.f32 %v1276, %v1304
        %v1313 = vmul.f32 %v1277, %v1304
        %v1314 = vmul.f32 %v1278, %v1304
        %v1315 = vmul.f32 %v1279, %v1304
        %v1316 = vmul.f32 %v1280, %v1304
        %v1317 = vmul.f32 %v1281, %v1304
        %v1318 = vmul.f32 %v1282, %v1304
        %v1319 = vmul.f32 %v1283, %v1304
        %v1320 = vmul.f32 %v1284, %v1304
        %v1321 = vmul.f32 %v1285, %v1304
        %v1322 = vmul.f32 %v1286, %v1304
        %v1323 = vmul.f32 %v1287, %v1304
        %v1324 = vmul.f32 %v1288, %v1304
        %v1325 = vmul.f32 %v1289, %v1304
        %v1326 = vmul.f32 %v1290, %v1304
        %v1327 = vmul.f32 %v1291, %v1304
        %v1328 = vmul.f32 %v1292, %v1304
        %v1329 = vmul.f32 %v1293, %v1304
        %v1330 = vmul.f32 %v1294, %v1304
        %v1331 = vmul.f32 %v1295, %v1304
        %v1332 = vmul.f32 %v1296, %v1304
        %v1333 = vmul.f32 %v1297, %v1304
        %v1334 = vmul.f32 %v1298, %v1304
        %v1335 = vmul.f32 %v1299, %v1304
        %v1336 = vmul.f32 %v1300, %v1304
        %v1337 = vadd.f32 %v1237, %v1305
        %v1338 = vadd.f32 %v1238, %v1306
        %v1339 = vadd.f32 %v1239, %v1307
        %v1340 = vadd.f32 %v1240, %v1308
        %v1341 = vadd.f32 %v1241, %v1309
        %v1342 = vadd.f32 %v1242, %v1310
        %v1343 = vadd.f32 %v1243, %v1311
        %v1344 = vadd.f32 %v1244, %v1312
        %v1345 = vadd.f32 %v1245, %v1313
        %v1346 = vadd.f32 %v1246, %v1314
        %v1347 = vadd.f32 %v1247, %v1315
        %v1348 = vadd.f32 %v1248, %v1316
        %v1349 = vadd.f32 %v1249, %v1317
        %v1350 = vadd.f32 %v1250, %v1318
        %v1351 = vadd.f32 %v1251, %v1319
        %v1352 = vadd.f32 %v1252, %v1320
        %v1353 = vadd.f32 %v1253, %v1321
        %v1354 = vadd.f32 %v1254, %v1322
        %v1355 = vadd.f32 %v1255, %v1323
        %v1356 = vadd.f32 %v1256, %v1324
        %v1357 = vadd.f32 %v1257, %v1325
        %v1358 = vadd.f32 %v1258, %v1326
        %v1359 = vadd.f32 %v1259, %v1327
        %v1360 = vadd.f32 %v1260, %v1328
        %v1361 = vadd.f32 %v1261, %v1329
        %v1362 = vadd.f32 %v1262, %v1330
        %v1363 = vadd.f32 %v1263, %v1331
        %v1364 = vadd.f32 %v1264, %v1332
        %v1365 = vadd.f32 %v1265, %v1333
        %v1366 = vadd.f32 %v1266, %v1334
        %v1367 = vadd.f32 %v1267, %v1335
        %v1368 = vadd.f32 %v1268, %v1336
        %v1369 = vld [vmem:[%s834 + $0x2] sm:$0xff]
        %v1370 = vld [vmem:[%s834 + $0xa] sm:$0xff]
        %v1371 = vld [vmem:[%s834 + $0x1a] sm:$0xff]
        %v1372 = vld [vmem:[%s834 + $0x22] sm:$0xff]
        %v1373 = vld [vmem:[%s834 + $0x32] sm:$0xff]
        %v1374 = vld [vmem:[%s834 + $0x3a] sm:$0xff]
        %v1375 = vld [vmem:[%s834 + $0x4a] sm:$0xff]
        %v1376 = vld [vmem:[%s834 + $0x52] sm:$0xff]
        %v1377 = vld [vmem:[%s834 + $0x62] sm:$0xff]
        %v1378 = vld [vmem:[%s834 + $0x6a] sm:$0xff]
        %v1379 = vld [vmem:[%s834 + $0x7a] sm:$0xff]
        %v1380 = vld [vmem:[%s834 + $0x82] sm:$0xff]
        %v1381 = vld [vmem:[%s834 + $0x92] sm:$0xff]
        %v1382 = vld [vmem:[%s834 + $0x9a] sm:$0xff]
        %v1383 = vld [vmem:[%s834 + $0xaa] sm:$0xff]
        %v1384 = vld [vmem:[%s834 + $0xb2] sm:$0xff]
        %v1385 = vld [vmem:[%s834 + $0xc2] sm:$0xff]
        %v1386 = vld [vmem:[%s834 + $0xca] sm:$0xff]
        %v1387 = vld [vmem:[%s834 + $0xda] sm:$0xff]
        %v1388 = vld [vmem:[%s834 + $0xe2] sm:$0xff]
        %v1389 = vld [vmem:[%s834 + $0xf2] sm:$0xff]
        %v1390 = vld [vmem:[%s834 + $0xfa] sm:$0xff]
        %v1391 = vld [vmem:[%s834 + $0x10a] sm:$0xff]
        %v1392 = vld [vmem:[%s834 + $0x112] sm:$0xff]
        %v1393 = vld [vmem:[%s834 + $0x122] sm:$0xff]
        %v1394 = vld [vmem:[%s834 + $0x12a] sm:$0xff]
        %v1395 = vld [vmem:[%s834 + $0x13a] sm:$0xff]
        %v1396 = vld [vmem:[%s834 + $0x142] sm:$0xff]
        %v1397 = vld [vmem:[%s834 + $0x152] sm:$0xff]
        %v1398 = vld [vmem:[%s834 + $0x15a] sm:$0xff]
        %v1399 = vld [vmem:[%s834 + $0x16a] sm:$0xff]
        %v1400 = vld [vmem:[%s834 + $0x172] sm:$0xff]
        %v1401 = vlaneseq
        %v1402 = vshrl.u32 %v1401, 7
        %v1403 = vsub.s32 5, %v1402
        %v1404 = vrot.slane %v867, %v1403
        %v1405 = vmul.f32 %v1369, %v1404
        %v1406 = vmul.f32 %v1370, %v1404
        %v1407 = vmul.f32 %v1371, %v1404
        %v1408 = vmul.f32 %v1372, %v1404
        %v1409 = vmul.f32 %v1373, %v1404
        %v1410 = vmul.f32 %v1374, %v1404
        %v1411 = vmul.f32 %v1375, %v1404
        %v1412 = vmul.f32 %v1376, %v1404
        %v1413 = vmul.f32 %v1377, %v1404
        %v1414 = vmul.f32 %v1378, %v1404
        %v1415 = vmul.f32 %v1379, %v1404
        %v1416 = vmul.f32 %v1380, %v1404
        %v1417 = vmul.f32 %v1381, %v1404
        %v1418 = vmul.f32 %v1382, %v1404
        %v1419 = vmul.f32 %v1383, %v1404
        %v1420 = vmul.f32 %v1384, %v1404
        %v1421 = vmul.f32 %v1385, %v1404
        %v1422 = vmul.f32 %v1386, %v1404
        %v1423 = vmul.f32 %v1387, %v1404
        %v1424 = vmul.f32 %v1388, %v1404
        %v1425 = vmul.f32 %v1389, %v1404
        %v1426 = vmul.f32 %v1390, %v1404
        %v1427 = vmul.f32 %v1391, %v1404
        %v1428 = vmul.f32 %v1392, %v1404
        %v1429 = vmul.f32 %v1393, %v1404
        %v1430 = vmul.f32 %v1394, %v1404
        %v1431 = vmul.f32 %v1395, %v1404
        %v1432 = vmul.f32 %v1396, %v1404
        %v1433 = vmul.f32 %v1397, %v1404
        %v1434 = vmul.f32 %v1398, %v1404
        %v1435 = vmul.f32 %v1399, %v1404
        %v1436 = vmul.f32 %v1400, %v1404
        %v1437 = vadd.f32 %v1337, %v1405
        %v1438 = vadd.f32 %v1338, %v1406
        %v1439 = vadd.f32 %v1339, %v1407
        %v1440 = vadd.f32 %v1340, %v1408
        %v1441 = vadd.f32 %v1341, %v1409
        %v1442 = vadd.f32 %v1342, %v1410
        %v1443 = vadd.f32 %v1343, %v1411
        %v1444 = vadd.f32 %v1344, %v1412
        %v1445 = vadd.f32 %v1345, %v1413
        %v1446 = vadd.f32 %v1346, %v1414
        %v1447 = vadd.f32 %v1347, %v1415
        %v1448 = vadd.f32 %v1348, %v1416
        %v1449 = vadd.f32 %v1349, %v1417
        %v1450 = vadd.f32 %v1350, %v1418
        %v1451 = vadd.f32 %v1351, %v1419
        %v1452 = vadd.f32 %v1352, %v1420
        %v1453 = vadd.f32 %v1353, %v1421
        %v1454 = vadd.f32 %v1354, %v1422
        %v1455 = vadd.f32 %v1355, %v1423
        %v1456 = vadd.f32 %v1356, %v1424
        %v1457 = vadd.f32 %v1357, %v1425
        %v1458 = vadd.f32 %v1358, %v1426
        %v1459 = vadd.f32 %v1359, %v1427
        %v1460 = vadd.f32 %v1360, %v1428
        %v1461 = vadd.f32 %v1361, %v1429
        %v1462 = vadd.f32 %v1362, %v1430
        %v1463 = vadd.f32 %v1363, %v1431
        %v1464 = vadd.f32 %v1364, %v1432
        %v1465 = vadd.f32 %v1365, %v1433
        %v1466 = vadd.f32 %v1366, %v1434
        %v1467 = vadd.f32 %v1367, %v1435
        %v1468 = vadd.f32 %v1368, %v1436
        %s1469 = scalar_lea.vmem [#allocation2], 48
        %v1470 = vld [vmem:[%s1469] sm:$0xff]
        %v1471 = vld [vmem:[%s1469 + $0x8] sm:$0xff]
        %v1472 = vld [vmem:[%s1469 + $0x18] sm:$0xff]
        %v1473 = vld [vmem:[%s1469 + $0x20] sm:$0xff]
        %v1474 = vld [vmem:[%s1469 + $0x30] sm:$0xff]
        %v1475 = vld [vmem:[%s1469 + $0x38] sm:$0xff]
        %v1476 = vld [vmem:[%s1469 + $0x48] sm:$0xff]
        %v1477 = vld [vmem:[%s1469 + $0x50] sm:$0xff]
        %v1478 = vld [vmem:[%s1469 + $0x60] sm:$0xff]
        %v1479 = vld [vmem:[%s1469 + $0x68] sm:$0xff]
        %v1480 = vld [vmem:[%s1469 + $0x78] sm:$0xff]
        %v1481 = vld [vmem:[%s1469 + $0x80] sm:$0xff]
        %v1482 = vld [vmem:[%s1469 + $0x90] sm:$0xff]
        %v1483 = vld [vmem:[%s1469 + $0x98] sm:$0xff]
        %v1484 = vld [vmem:[%s1469 + $0xa8] sm:$0xff]
        %v1485 = vld [vmem:[%s1469 + $0xb0] sm:$0xff]
        %v1486 = vld [vmem:[%s1469 + $0xc0] sm:$0xff]
        %v1487 = vld [vmem:[%s1469 + $0xc8] sm:$0xff]
        %v1488 = vld [vmem:[%s1469 + $0xd8] sm:$0xff]
        %v1489 = vld [vmem:[%s1469 + $0xe0] sm:$0xff]
        %v1490 = vld [vmem:[%s1469 + $0xf0] sm:$0xff]
        %v1491 = vld [vmem:[%s1469 + $0xf8] sm:$0xff]
        %v1492 = vld [vmem:[%s1469 + $0x108] sm:$0xff]
        %v1493 = vld [vmem:[%s1469 + $0x110] sm:$0xff]
        %v1494 = vld [vmem:[%s1469 + $0x120] sm:$0xff]
        %v1495 = vld [vmem:[%s1469 + $0x128] sm:$0xff]
        %v1496 = vld [vmem:[%s1469 + $0x138] sm:$0xff]
        %v1497 = vld [vmem:[%s1469 + $0x140] sm:$0xff]
        %v1498 = vld [vmem:[%s1469 + $0x150] sm:$0xff]
        %v1499 = vld [vmem:[%s1469 + $0x158] sm:$0xff]
        %v1500 = vld [vmem:[%s1469 + $0x168] sm:$0xff]
        %v1501 = vld [vmem:[%s1469 + $0x170] sm:$0xff]
        %v1502 = vlaneseq
        %v1503 = vshrl.u32 %v1502, 7
        %v1504 = vsub.s32 6, %v1503
        %v1505 = vrot.slane %v867, %v1504
        %v1506 = vmul.f32 %v1470, %v1505
        %v1507 = vmul.f32 %v1471, %v1505
        %v1508 = vmul.f32 %v1472, %v1505
        %v1509 = vmul.f32 %v1473, %v1505
        %v1510 = vmul.f32 %v1474, %v1505
        %v1511 = vmul.f32 %v1475, %v1505
        %v1512 = vmul.f32 %v1476, %v1505
        %v1513 = vmul.f32 %v1477, %v1505
        %v1514 = vmul.f32 %v1478, %v1505
        %v1515 = vmul.f32 %v1479, %v1505
        %v1516 = vmul.f32 %v1480, %v1505
        %v1517 = vmul.f32 %v1481, %v1505
        %v1518 = vmul.f32 %v1482, %v1505
        %v1519 = vmul.f32 %v1483, %v1505
        %v1520 = vmul.f32 %v1484, %v1505
        %v1521 = vmul.f32 %v1485, %v1505
        %v1522 = vmul.f32 %v1486, %v1505
        %v1523 = vmul.f32 %v1487, %v1505
        %v1524 = vmul.f32 %v1488, %v1505
        %v1525 = vmul.f32 %v1489, %v1505
        %v1526 = vmul.f32 %v1490, %v1505
        %v1527 = vmul.f32 %v1491, %v1505
        %v1528 = vmul.f32 %v1492, %v1505
        %v1529 = vmul.f32 %v1493, %v1505
        %v1530 = vmul.f32 %v1494, %v1505
        %v1531 = vmul.f32 %v1495, %v1505
        %v1532 = vmul.f32 %v1496, %v1505
        %v1533 = vmul.f32 %v1497, %v1505
        %v1534 = vmul.f32 %v1498, %v1505
        %v1535 = vmul.f32 %v1499, %v1505
        %v1536 = vmul.f32 %v1500, %v1505
        %v1537 = vmul.f32 %v1501, %v1505
        %v1538 = vadd.f32 %v1437, %v1506
        %v1539 = vadd.f32 %v1438, %v1507
        %v1540 = vadd.f32 %v1439, %v1508
        %v1541 = vadd.f32 %v1440, %v1509
        %v1542 = vadd.f32 %v1441, %v1510
        %v1543 = vadd.f32 %v1442, %v1511
        %v1544 = vadd.f32 %v1443, %v1512
        %v1545 = vadd.f32 %v1444, %v1513
        %v1546 = vadd.f32 %v1445, %v1514
        %v1547 = vadd.f32 %v1446, %v1515
        %v1548 = vadd.f32 %v1447, %v1516
        %v1549 = vadd.f32 %v1448, %v1517
        %v1550 = vadd.f32 %v1449, %v1518
        %v1551 = vadd.f32 %v1450, %v1519
        %v1552 = vadd.f32 %v1451, %v1520
        %v1553 = vadd.f32 %v1452, %v1521
        %v1554 = vadd.f32 %v1453, %v1522
        %v1555 = vadd.f32 %v1454, %v1523
        %v1556 = vadd.f32 %v1455, %v1524
        %v1557 = vadd.f32 %v1456, %v1525
        %v1558 = vadd.f32 %v1457, %v1526
        %v1559 = vadd.f32 %v1458, %v1527
        %v1560 = vadd.f32 %v1459, %v1528
        %v1561 = vadd.f32 %v1460, %v1529
        %v1562 = vadd.f32 %v1461, %v1530
        %v1563 = vadd.f32 %v1462, %v1531
        %v1564 = vadd.f32 %v1463, %v1532
        %v1565 = vadd.f32 %v1464, %v1533
        %v1566 = vadd.f32 %v1465, %v1534
        %v1567 = vadd.f32 %v1466, %v1535
        %v1568 = vadd.f32 %v1467, %v1536
        %v1569 = vadd.f32 %v1468, %v1537
        %v1570 = vld [vmem:[%s1469 + $0x1] sm:$0xff]
        %v1571 = vld [vmem:[%s1469 + $0x9] sm:$0xff]
        %v1572 = vld [vmem:[%s1469 + $0x19] sm:$0xff]
        %v1573 = vld [vmem:[%s1469 + $0x21] sm:$0xff]
        %v1574 = vld [vmem:[%s1469 + $0x31] sm:$0xff]
        %v1575 = vld [vmem:[%s1469 + $0x39] sm:$0xff]
        %v1576 = vld [vmem:[%s1469 + $0x49] sm:$0xff]
        %v1577 = vld [vmem:[%s1469 + $0x51] sm:$0xff]
        %v1578 = vld [vmem:[%s1469 + $0x61] sm:$0xff]
        %v1579 = vld [vmem:[%s1469 + $0x69] sm:$0xff]
        %v1580 = vld [vmem:[%s1469 + $0x79] sm:$0xff]
        %v1581 = vld [vmem:[%s1469 + $0x81] sm:$0xff]
        %v1582 = vld [vmem:[%s1469 + $0x91] sm:$0xff]
        %v1583 = vld [vmem:[%s1469 + $0x99] sm:$0xff]
        %v1584 = vld [vmem:[%s1469 + $0xa9] sm:$0xff]
        %v1585 = vld [vmem:[%s1469 + $0xb1] sm:$0xff]
        %v1586 = vld [vmem:[%s1469 + $0xc1] sm:$0xff]
        %v1587 = vld [vmem:[%s1469 + $0xc9] sm:$0xff]
        %v1588 = vld [vmem:[%s1469 + $0xd9] sm:$0xff]
        %v1589 = vld [vmem:[%s1469 + $0xe1] sm:$0xff]
        %v1590 = vld [vmem:[%s1469 + $0xf1] sm:$0xff]
        %v1591 = vld [vmem:[%s1469 + $0xf9] sm:$0xff]
        %v1592 = vld [vmem:[%s1469 + $0x109] sm:$0xff]
        %v1593 = vld [vmem:[%s1469 + $0x111] sm:$0xff]
        %v1594 = vld [vmem:[%s1469 + $0x121] sm:$0xff]
        %v1595 = vld [vmem:[%s1469 + $0x129] sm:$0xff]
        %v1596 = vld [vmem:[%s1469 + $0x139] sm:$0xff]
        %v1597 = vld [vmem:[%s1469 + $0x141] sm:$0xff]
        %v1598 = vld [vmem:[%s1469 + $0x151] sm:$0xff]
        %v1599 = vld [vmem:[%s1469 + $0x159] sm:$0xff]
        %v1600 = vld [vmem:[%s1469 + $0x169] sm:$0xff]
        %v1601 = vld [vmem:[%s1469 + $0x171] sm:$0xff]
        %v1602 = vlaneseq
        %v1603 = vshrl.u32 %v1602, 7
        %v1604 = vsub.s32 7, %v1603
        %v1605 = vrot.slane %v867, %v1604
        %v1606 = vmul.f32 %v1570, %v1605
        %v1607 = vmul.f32 %v1571, %v1605
        %v1608 = vmul.f32 %v1572, %v1605
        %v1609 = vmul.f32 %v1573, %v1605
        %v1610 = vmul.f32 %v1574, %v1605
        %v1611 = vmul.f32 %v1575, %v1605
        %v1612 = vmul.f32 %v1576, %v1605
        %v1613 = vmul.f32 %v1577, %v1605
        %v1614 = vmul.f32 %v1578, %v1605
        %v1615 = vmul.f32 %v1579, %v1605
        %v1616 = vmul.f32 %v1580, %v1605
        %v1617 = vmul.f32 %v1581, %v1605
        %v1618 = vmul.f32 %v1582, %v1605
        %v1619 = vmul.f32 %v1583, %v1605
        %v1620 = vmul.f32 %v1584, %v1605
        %v1621 = vmul.f32 %v1585, %v1605
        %v1622 = vmul.f32 %v1586, %v1605
        %v1623 = vmul.f32 %v1587, %v1605
        %v1624 = vmul.f32 %v1588, %v1605
        %v1625 = vmul.f32 %v1589, %v1605
        %v1626 = vmul.f32 %v1590, %v1605
        %v1627 = vmul.f32 %v1591, %v1605
        %v1628 = vmul.f32 %v1592, %v1605
        %v1629 = vmul.f32 %v1593, %v1605
        %v1630 = vmul.f32 %v1594, %v1605
        %v1631 = vmul.f32 %v1595, %v1605
        %v1632 = vmul.f32 %v1596, %v1605
        %v1633 = vmul.f32 %v1597, %v1605
        %v1634 = vmul.f32 %v1598, %v1605
        %v1635 = vmul.f32 %v1599, %v1605
        %v1636 = vmul.f32 %v1600, %v1605
        %v1637 = vmul.f32 %v1601, %v1605
        %v1638 = vadd.f32 %v1538, %v1606
        %v1639 = vadd.f32 %v1539, %v1607
        %v1640 = vadd.f32 %v1540, %v1608
        %v1641 = vadd.f32 %v1541, %v1609
        %v1642 = vadd.f32 %v1542, %v1610
        %v1643 = vadd.f32 %v1543, %v1611
        %v1644 = vadd.f32 %v1544, %v1612
        %v1645 = vadd.f32 %v1545, %v1613
        %v1646 = vadd.f32 %v1546, %v1614
        %v1647 = vadd.f32 %v1547, %v1615
        %v1648 = vadd.f32 %v1548, %v1616
        %v1649 = vadd.f32 %v1549, %v1617
        %v1650 = vadd.f32 %v1550, %v1618
        %v1651 = vadd.f32 %v1551, %v1619
        %v1652 = vadd.f32 %v1552, %v1620
        %v1653 = vadd.f32 %v1553, %v1621
        %v1654 = vadd.f32 %v1554, %v1622
        %v1655 = vadd.f32 %v1555, %v1623
        %v1656 = vadd.f32 %v1556, %v1624
        %v1657 = vadd.f32 %v1557, %v1625
        %v1658 = vadd.f32 %v1558, %v1626
        %v1659 = vadd.f32 %v1559, %v1627
        %v1660 = vadd.f32 %v1560, %v1628
        %v1661 = vadd.f32 %v1561, %v1629
        %v1662 = vadd.f32 %v1562, %v1630
        %v1663 = vadd.f32 %v1563, %v1631
        %v1664 = vadd.f32 %v1564, %v1632
        %v1665 = vadd.f32 %v1565, %v1633
        %v1666 = vadd.f32 %v1566, %v1634
        %v1667 = vadd.f32 %v1567, %v1635
        %v1668 = vadd.f32 %v1568, %v1636
        %v1669 = vadd.f32 %v1569, %v1637
        %v1670 = vld [vmem:[%s1469 + $0x2] sm:$0xff]
        %v1671 = vld [vmem:[%s1469 + $0xa] sm:$0xff]
        %v1672 = vld [vmem:[%s1469 + $0x1a] sm:$0xff]
        %v1673 = vld [vmem:[%s1469 + $0x22] sm:$0xff]
        %v1674 = vld [vmem:[%s1469 + $0x32] sm:$0xff]
        %v1675 = vld [vmem:[%s1469 + $0x3a] sm:$0xff]
        %v1676 = vld [vmem:[%s1469 + $0x4a] sm:$0xff]
        %v1677 = vld [vmem:[%s1469 + $0x52] sm:$0xff]
        %v1678 = vld [vmem:[%s1469 + $0x62] sm:$0xff]
        %v1679 = vld [vmem:[%s1469 + $0x6a] sm:$0xff]
        %v1680 = vld [vmem:[%s1469 + $0x7a] sm:$0xff]
        %v1681 = vld [vmem:[%s1469 + $0x82] sm:$0xff]
        %v1682 = vld [vmem:[%s1469 + $0x92] sm:$0xff]
        %v1683 = vld [vmem:[%s1469 + $0x9a] sm:$0xff]
        %v1684 = vld [vmem:[%s1469 + $0xaa] sm:$0xff]
        %v1685 = vld [vmem:[%s1469 + $0xb2] sm:$0xff]
        %v1686 = vld [vmem:[%s1469 + $0xc2] sm:$0xff]
        %v1687 = vld [vmem:[%s1469 + $0xca] sm:$0xff]
        %v1688 = vld [vmem:[%s1469 + $0xda] sm:$0xff]
        %v1689 = vld [vmem:[%s1469 + $0xe2] sm:$0xff]
        %v1690 = vld [vmem:[%s1469 + $0xf2] sm:$0xff]
        %v1691 = vld [vmem:[%s1469 + $0xfa] sm:$0xff]
        %v1692 = vld [vmem:[%s1469 + $0x10a] sm:$0xff]
        %v1693 = vld [vmem:[%s1469 + $0x112] sm:$0xff]
        %v1694 = vld [vmem:[%s1469 + $0x122] sm:$0xff]
        %v1695 = vld [vmem:[%s1469 + $0x12a] sm:$0xff]
        %v1696 = vld [vmem:[%s1469 + $0x13a] sm:$0xff]
        %v1697 = vld [vmem:[%s1469 + $0x142] sm:$0xff]
        %v1698 = vld [vmem:[%s1469 + $0x152] sm:$0xff]
        %v1699 = vld [vmem:[%s1469 + $0x15a] sm:$0xff]
        %v1700 = vld [vmem:[%s1469 + $0x16a] sm:$0xff]
        %v1701 = vld [vmem:[%s1469 + $0x172] sm:$0xff]
        %v1702 = vlaneseq
        %v1703 = vshrl.u32 %v1702, 7
        %v1704 = vsub.s32 0, %v1703
        %v1705 = vrot.slane %v868, %v1704
        %v1706 = vmul.f32 %v1670, %v1705
        %v1707 = vmul.f32 %v1671, %v1705
        %v1708 = vmul.f32 %v1672, %v1705
        %v1709 = vmul.f32 %v1673, %v1705
        %v1710 = vmul.f32 %v1674, %v1705
        %v1711 = vmul.f32 %v1675, %v1705
        %v1712 = vmul.f32 %v1676, %v1705
        %v1713 = vmul.f32 %v1677, %v1705
        %v1714 = vmul.f32 %v1678, %v1705
        %v1715 = vmul.f32 %v1679, %v1705
        %v1716 = vmul.f32 %v1680, %v1705
        %v1717 = vmul.f32 %v1681, %v1705
        %v1718 = vmul.f32 %v1682, %v1705
        %v1719 = vmul.f32 %v1683, %v1705
        %v1720 = vmul.f32 %v1684, %v1705
        %v1721 = vmul.f32 %v1685, %v1705
        %v1722 = vmul.f32 %v1686, %v1705
        %v1723 = vmul.f32 %v1687, %v1705
        %v1724 = vmul.f32 %v1688, %v1705
        %v1725 = vmul.f32 %v1689, %v1705
        %v1726 = vmul.f32 %v1690, %v1705
        %v1727 = vmul.f32 %v1691, %v1705
        %v1728 = vmul.f32 %v1692, %v1705
        %v1729 = vmul.f32 %v1693, %v1705
        %v1730 = vmul.f32 %v1694, %v1705
        %v1731 = vmul.f32 %v1695, %v1705
        %v1732 = vmul.f32 %v1696, %v1705
        %v1733 = vmul.f32 %v1697, %v1705
        %v1734 = vmul.f32 %v1698, %v1705
        %v1735 = vmul.f32 %v1699, %v1705
        %v1736 = vmul.f32 %v1700, %v1705
        %v1737 = vmul.f32 %v1701, %v1705
        %v1738 = vadd.f32 %v1638, %v1706
        %v1739 = vadd.f32 %v1639, %v1707
        %v1740 = vadd.f32 %v1640, %v1708
        %v1741 = vadd.f32 %v1641, %v1709
        %v1742 = vadd.f32 %v1642, %v1710
        %v1743 = vadd.f32 %v1643, %v1711
        %v1744 = vadd.f32 %v1644, %v1712
        %v1745 = vadd.f32 %v1645, %v1713
        %v1746 = vadd.f32 %v1646, %v1714
        %v1747 = vadd.f32 %v1647, %v1715
        %v1748 = vadd.f32 %v1648, %v1716
        %v1749 = vadd.f32 %v1649, %v1717
        %v1750 = vadd.f32 %v1650, %v1718
        %v1751 = vadd.f32 %v1651, %v1719
        %v1752 = vadd.f32 %v1652, %v1720
        %v1753 = vadd.f32 %v1653, %v1721
        %v1754 = vadd.f32 %v1654, %v1722
        %v1755 = vadd.f32 %v1655, %v1723
        %v1756 = vadd.f32 %v1656, %v1724
        %v1757 = vadd.f32 %v1657, %v1725
        %v1758 = vadd.f32 %v1658, %v1726
        %v1759 = vadd.f32 %v1659, %v1727
        %v1760 = vadd.f32 %v1660, %v1728
        %v1761 = vadd.f32 %v1661, %v1729
        %v1762 = vadd.f32 %v1662, %v1730
        %v1763 = vadd.f32 %v1663, %v1731
        %v1764 = vadd.f32 %v1664, %v1732
        %v1765 = vadd.f32 %v1665, %v1733
        %v1766 = vadd.f32 %v1666, %v1734
        %v1767 = vadd.f32 %v1667, %v1735
        %v1768 = vadd.f32 %v1668, %v1736
        %v1769 = vadd.f32 %v1669, %v1737
        %v1770 = vld [vmem:[%s4] sm:$0x1]
        %v1772 = vlaneseq
        %v1773 = vshrl.u32 %v1772, 7
        %v1774 = vsub.s32 0, %v1773
        %v1775 = vrot.slane %v1770, %v1774
        %v1777 = vadd.f32 %v1738, %v1775
        %v1778 = vadd.f32 %v1739, %v1775
        %v1779 = vadd.f32 %v1740, %v1775
        %v1780 = vadd.f32 %v1741, %v1775
        %v1781 = vadd.f32 %v1742, %v1775
        %v1782 = vadd.f32 %v1743, %v1775
        %v1783 = vadd.f32 %v1744, %v1775
        %v1784 = vadd.f32 %v1745, %v1775
        %v1785 = vadd.f32 %v1746, %v1775
        %v1786 = vadd.f32 %v1747, %v1775
        %v1787 = vadd.f32 %v1748, %v1775
        %v1788 = vadd.f32 %v1749, %v1775
        %v1789 = vadd.f32 %v1750, %v1775
        %v1790 = vadd.f32 %v1751, %v1775
        %v1791 = vadd.f32 %v1752, %v1775
        %v1792 = vadd.f32 %v1753, %v1775
        %v1793 = vadd.f32 %v1754, %v1775
        %v1794 = vadd.f32 %v1755, %v1775
        %v1795 = vadd.f32 %v1756, %v1775
        %v1796 = vadd.f32 %v1757, %v1775
        %v1797 = vadd.f32 %v1758, %v1775
        %v1798 = vadd.f32 %v1759, %v1775
        %v1799 = vadd.f32 %v1760, %v1775
        %v1800 = vadd.f32 %v1761, %v1775
        %v1801 = vadd.f32 %v1762, %v1775
        %v1802 = vadd.f32 %v1763, %v1775
        %v1803 = vadd.f32 %v1764, %v1775
        %v1804 = vadd.f32 %v1765, %v1775
        %v1805 = vadd.f32 %v1766, %v1775
        %v1806 = vadd.f32 %v1767, %v1775
        %v1807 = vadd.f32 %v1768, %v1775
        %v1808 = vadd.f32 %v1769, %v1775
        %v1809 = vmul.f32 %v1777, 0.5
        %v1810 = vmul.f32 %v1778, 0.5
        %v1811 = vmul.f32 %v1779, 0.5
        %v1812 = vmul.f32 %v1780, 0.5
        %v1813 = vmul.f32 %v1781, 0.5
        %v1814 = vmul.f32 %v1782, 0.5
        %v1815 = vmul.f32 %v1783, 0.5
        %v1816 = vmul.f32 %v1784, 0.5
        %v1817 = vmul.f32 %v1785, 0.5
        %v1818 = vmul.f32 %v1786, 0.5
        %v1819 = vmul.f32 %v1787, 0.5
        %v1820 = vmul.f32 %v1788, 0.5
        %v1821 = vmul.f32 %v1789, 0.5
        %v1822 = vmul.f32 %v1790, 0.5
        %v1823 = vmul.f32 %v1791, 0.5
        %v1824 = vmul.f32 %v1792, 0.5
        %v1825 = vmul.f32 %v1793, 0.5
        %v1826 = vmul.f32 %v1794, 0.5
        %v1827 = vmul.f32 %v1795, 0.5
        %v1828 = vmul.f32 %v1796, 0.5
        %v1829 = vmul.f32 %v1797, 0.5
        %v1830 = vmul.f32 %v1798, 0.5
        %v1831 = vmul.f32 %v1799, 0.5
        %v1832 = vmul.f32 %v1800, 0.5
        %v1833 = vmul.f32 %v1801, 0.5
        %v1834 = vmul.f32 %v1802, 0.5
        %v1835 = vmul.f32 %v1803, 0.5
        %v1836 = vmul.f32 %v1804, 0.5
        %v1837 = vmul.f32 %v1805, 0.5
        %v1838 = vmul.f32 %v1806, 0.5
        %v1839 = vmul.f32 %v1807, 0.5
        %v1840 = vmul.f32 %v1808, 0.5
        %v1841 = vmul.f32 %v1777, 0.044715
        %v1842 = vmul.f32 %v1778, 0.044715
        %v1843 = vmul.f32 %v1779, 0.044715
        %v1844 = vmul.f32 %v1780, 0.044715
        %v1845 = vmul.f32 %v1781, 0.044715
        %v1846 = vmul.f32 %v1782, 0.044715
        %v1847 = vmul.f32 %v1783, 0.044715
        %v1848 = vmul.f32 %v1784, 0.044715
        %v1849 = vmul.f32 %v1785, 0.044715
        %v1850 = vmul.f32 %v1786, 0.044715
        %v1851 = vmul.f32 %v1787, 0.044715
        %v1852 = vmul.f32 %v1788, 0.044715
        %v1853 = vmul.f32 %v1789, 0.044715
        %v1854 = vmul.f32 %v1790, 0.044715
        %v1855 = vmul.f32 %v1791, 0.044715
        %v1856 = vmul.f32 %v1792, 0.044715
        %v1857 = vmul.f32 %v1793, 0.044715
        %v1858 = vmul.f32 %v1794, 0.044715
        %v1859 = vmul.f32 %v1795, 0.044715
        %v1860 = vmul.f32 %v1796, 0.044715
        %v1861 = vmul.f32 %v1797, 0.044715
        %v1862 = vmul.f32 %v1798, 0.044715
        %v1863 = vmul.f32 %v1799, 0.044715
        %v1864 = vmul.f32 %v1800, 0.044715
        %v1865 = vmul.f32 %v1801, 0.044715
        %v1866 = vmul.f32 %v1802, 0.044715
        %v1867 = vmul.f32 %v1803, 0.044715
        %v1868 = vmul.f32 %v1804, 0.044715
        %v1869 = vmul.f32 %v1805, 0.044715
        %v1870 = vmul.f32 %v1806, 0.044715
        %v1871 = vmul.f32 %v1807, 0.044715
        %v1872 = vmul.f32 %v1808, 0.044715
        %v1873 = vmul.f32 %v1841, %v1777
        %v1874 = vmul.f32 %v1842, %v1778
        %v1875 = vmul.f32 %v1843, %v1779
        %v1876 = vmul.f32 %v1844, %v1780
        %v1877 = vmul.f32 %v1845, %v1781
        %v1878 = vmul.f32 %v1846, %v1782
        %v1879 = vmul.f32 %v1847, %v1783
        %v1880 = vmul.f32 %v1848, %v1784
        %v1881 = vmul.f32 %v1849, %v1785
        %v1882 = vmul.f32 %v1850, %v1786
        %v1883 = vmul.f32 %v1851, %v1787
        %v1884 = vmul.f32 %v1852, %v1788
        %v1885 = vmul.f32 %v1853, %v1789
        %v1886 = vmul.f32 %v1854, %v1790
        %v1887 = vmul.f32 %v1855, %v1791
        %v1888 = vmul.f32 %v1856, %v1792
        %v1889 = vmul.f32 %v1857, %v1793
        %v1890 = vmul.f32 %v1858, %v1794
        %v1891 = vmul.f32 %v1859, %v1795
        %v1892 = vmul.f32 %v1860, %v1796
        %v1893 = vmul.f32 %v1861, %v1797
        %v1894 = vmul.f32 %v1862, %v1798
        %v1895 = vmul.f32 %v1863, %v1799
        %v1896 = vmul.f32 %v1864, %v1800
        %v1897 = vmul.f32 %v1865, %v1801
        %v1898 = vmul.f32 %v1866, %v1802
        %v1899 = vmul.f32 %v1867, %v1803
        %v1900 = vmul.f32 %v1868, %v1804
        %v1901 = vmul.f32 %v1869, %v1805
        %v1902 = vmul.f32 %v1870, %v1806
        %v1903 = vmul.f32 %v1871, %v1807
        %v1904 = vmul.f32 %v1872, %v1808
        %v1905 = vmul.f32 %v1873, %v1777
        %v1906 = vmul.f32 %v1874, %v1778
        %v1907 = vmul.f32 %v1875, %v1779
        %v1908 = vmul.f32 %v1876, %v1780
        %v1909 = vmul.f32 %v1877, %v1781
        %v1910 = vmul.f32 %v1878, %v1782
        %v1911 = vmul.f32 %v1879, %v1783
        %v1912 = vmul.f32 %v1880, %v1784
        %v1913 = vmul.f32 %v1881, %v1785
        %v1914 = vmul.f32 %v1882, %v1786
        %v1915 = vmul.f32 %v1883, %v1787
        %v1916 = vmul.f32 %v1884, %v1788
        %v1917 = vmul.f32 %v1885, %v1789
        %v1918 = vmul.f32 %v1886, %v1790
        %v1919 = vmul.f32 %v1887, %v1791
        %v1920 = vmul.f32 %v1888, %v1792
        %v1921 = vmul.f32 %v1889, %v1793
        %v1922 = vmul.f32 %v1890, %v1794
        %v1923 = vmul.f32 %v1891, %v1795
        %v1924 = vmul.f32 %v1892, %v1796
        %v1925 = vmul.f32 %v1893, %v1797
        %v1926 = vmul.f32 %v1894, %v1798
        %v1927 = vmul.f32 %v1895, %v1799
        %v1928 = vmul.f32 %v1896, %v1800
        %v1929 = vmul.f32 %v1897, %v1801
        %v1930 = vmul.f32 %v1898, %v1802
        %v1931 = vmul.f32 %v1899, %v1803
        %v1932 = vmul.f32 %v1900, %v1804
        %v1933 = vmul.f32 %v1901, %v1805
        %v1934 = vmul.f32 %v1902, %v1806
        %v1935 = vmul.f32 %v1903, %v1807
        %v1936 = vmul.f32 %v1904, %v1808
        %v1937 = vadd.f32 %v1777, %v1905
        %v1938 = vadd.f32 %v1778, %v1906
        %v1939 = vadd.f32 %v1779, %v1907
        %v1940 = vadd.f32 %v1780, %v1908
        %v1941 = vadd.f32 %v1781, %v1909
        %v1942 = vadd.f32 %v1782, %v1910
        %v1943 = vadd.f32 %v1783, %v1911
        %v1944 = vadd.f32 %v1784, %v1912
        %v1945 = vadd.f32 %v1785, %v1913
        %v1946 = vadd.f32 %v1786, %v1914
        %v1947 = vadd.f32 %v1787, %v1915
        %v1948 = vadd.f32 %v1788, %v1916
        %v1949 = vadd.f32 %v1789, %v1917
        %v1950 = vadd.f32 %v1790, %v1918
        %v1951 = vadd.f32 %v1791, %v1919
        %v1952 = vadd.f32 %v1792, %v1920
        %v1953 = vadd.f32 %v1793, %v1921
        %v1954 = vadd.f32 %v1794, %v1922
        %v1955 = vadd.f32 %v1795, %v1923
        %v1956 = vadd.f32 %v1796, %v1924
        %v1957 = vadd.f32 %v1797, %v1925
        %v1958 = vadd.f32 %v1798, %v1926
        %v1959 = vadd.f32 %v1799, %v1927
        %v1960 = vadd.f32 %v1800, %v1928
        %v1961 = vadd.f32 %v1801, %v1929
        %v1962 = vadd.f32 %v1802, %v1930
        %v1963 = vadd.f32 %v1803, %v1931
        %v1964 = vadd.f32 %v1804, %v1932
        %v1965 = vadd.f32 %v1805, %v1933
        %v1966 = vadd.f32 %v1806, %v1934
        %v1967 = vadd.f32 %v1807, %v1935
        %v1968 = vadd.f32 %v1808, %v1936
        %v1969 = vmul.f32 %v1937, 0.7978846
        %v1970 = vmul.f32 %v1938, 0.7978846
        %v1971 = vmul.f32 %v1939, 0.7978846
        %v1972 = vmul.f32 %v1940, 0.7978846
        %v1973 = vmul.f32 %v1941, 0.7978846
        %v1974 = vmul.f32 %v1942, 0.7978846
        %v1975 = vmul.f32 %v1943, 0.7978846
        %v1976 = vmul.f32 %v1944, 0.7978846
        %v1977 = vmul.f32 %v1945, 0.7978846
        %v1978 = vmul.f32 %v1946, 0.7978846
        %v1979 = vmul.f32 %v1947, 0.7978846
        %v1980 = vmul.f32 %v1948, 0.7978846
        %v1981 = vmul.f32 %v1949, 0.7978846
        %v1982 = vmul.f32 %v1950, 0.7978846
        %v1983 = vmul.f32 %v1951, 0.7978846
        %v1984 = vmul.f32 %v1952, 0.7978846
        %v1985 = vmul.f32 %v1953, 0.7978846
        %v1986 = vmul.f32 %v1954, 0.7978846
        %v1987 = vmul.f32 %v1955, 0.7978846
        %v1988 = vmul.f32 %v1956, 0.7978846
        %v1989 = vmul.f32 %v1957, 0.7978846
        %v1990 = vmul.f32 %v1958, 0.7978846
        %v1991 = vmul.f32 %v1959, 0.7978846
        %v1992 = vmul.f32 %v1960, 0.7978846
        %v1993 = vmul.f32 %v1961, 0.7978846
        %v1994 = vmul.f32 %v1962, 0.7978846
        %v1995 = vmul.f32 %v1963, 0.7978846
        %v1996 = vmul.f32 %v1964, 0.7978846
        %v1997 = vmul.f32 %v1965, 0.7978846
        %v1998 = vmul.f32 %v1966, 0.7978846
        %v1999 = vmul.f32 %v1967, 0.7978846
        %v2000 = vmul.f32 %v1968, 0.7978846
        %v2001 = vtanh.pop %v1969
        %v2002 = vtanh.pop %v1970
        %v2003 = vtanh.pop %v1971
        %v2004 = vtanh.pop %v1972
        %v2005 = vtanh.pop %v1973
        %v2006 = vtanh.pop %v1974
        %v2007 = vtanh.pop %v1975
        %v2008 = vtanh.pop %v1976
        %v2009 = vtanh.pop %v1977
        %v2010 = vtanh.pop %v1978
        %v2011 = vtanh.pop %v1979
        %v2012 = vtanh.pop %v1980
        %v2013 = vtanh.pop %v1981
        %v2014 = vtanh.pop %v1982
        %v2015 = vtanh.pop %v1983
        %v2016 = vtanh.pop %v1984
        %v2017 = vtanh.pop %v1985
        %v2018 = vtanh.pop %v1986
        %v2019 = vtanh.pop %v1987
        %v2020 = vtanh.pop %v1988
        %v2021 = vtanh.pop %v1989
        %v2022 = vtanh.pop %v1990
        %v2023 = vtanh.pop %v1991
        %v2024 = vtanh.pop %v1992
        %v2025 = vtanh.pop %v1993
        %v2026 = vtanh.pop %v1994
        %v2027 = vtanh.pop %v1995
        %v2028 = vtanh.pop %v1996
        %v2029 = vtanh.pop %v1997
        %v2030 = vtanh.pop %v1998
        %v2031 = vtanh.pop %v1999
        %v2032 = vtanh.pop %v2000
        %v2033 = vadd.f32 %v2001, 1.0
        %v2034 = vadd.f32 %v2002, 1.0
        %v2035 = vadd.f32 %v2003, 1.0
        %v2036 = vadd.f32 %v2004, 1.0
        %v2037 = vadd.f32 %v2005, 1.0
        %v2038 = vadd.f32 %v2006, 1.0
        %v2039 = vadd.f32 %v2007, 1.0
        %v2040 = vadd.f32 %v2008, 1.0
        %v2041 = vadd.f32 %v2009, 1.0
        %v2042 = vadd.f32 %v2010, 1.0
        %v2043 = vadd.f32 %v2011, 1.0
        %v2044 = vadd.f32 %v2012, 1.0
        %v2045 = vadd.f32 %v2013, 1.0
        %v2046 = vadd.f32 %v2014, 1.0
        %v2047 = vadd.f32 %v2015, 1.0
        %v2048 = vadd.f32 %v2016, 1.0
        %v2049 = vadd.f32 %v2017, 1.0
        %v2050 = vadd.f32 %v2018, 1.0
        %v2051 = vadd.f32 %v2019, 1.0
        %v2052 = vadd.f32 %v2020, 1.0
        %v2053 = vadd.f32 %v2021, 1.0
        %v2054 = vadd.f32 %v2022, 1.0
        %v2055 = vadd.f32 %v2023, 1.0
        %v2056 = vadd.f32 %v2024, 1.0
        %v2057 = vadd.f32 %v2025, 1.0
        %v2058 = vadd.f32 %v2026, 1.0
        %v2059 = vadd.f32 %v2027, 1.0
        %v2060 = vadd.f32 %v2028, 1.0
        %v2061 = vadd.f32 %v2029, 1.0
        %v2062 = vadd.f32 %v2030, 1.0
        %v2063 = vadd.f32 %v2031, 1.0
        %v2064 = vadd.f32 %v2032, 1.0
        %v2065 = vmul.f32 %v1809, %v2033
        %v2066 = vmul.f32 %v1810, %v2034
        %v2067 = vmul.f32 %v1811, %v2035
        %v2068 = vmul.f32 %v1812, %v2036
        %v2069 = vmul.f32 %v1813, %v2037
        %v2070 = vmul.f32 %v1814, %v2038
        %v2071 = vmul.f32 %v1815, %v2039
        %v2072 = vmul.f32 %v1816, %v2040
        %v2073 = vmul.f32 %v1817, %v2041
        %v2074 = vmul.f32 %v1818, %v2042
        %v2075 = vmul.f32 %v1819, %v2043
        %v2076 = vmul.f32 %v1820, %v2044
        %v2077 = vmul.f32 %v1821, %v2045
        %v2078 = vmul.f32 %v1822, %v2046
        %v2079 = vmul.f32 %v1823, %v2047
        %v2080 = vmul.f32 %v1824, %v2048
        %v2081 = vmul.f32 %v1825, %v2049
        %v2082 = vmul.f32 %v1826, %v2050
        %v2083 = vmul.f32 %v1827, %v2051
        %v2084 = vmul.f32 %v1828, %v2052
        %v2085 = vmul.f32 %v1829, %v2053
        %v2086 = vmul.f32 %v1830, %v2054
        %v2087 = vmul.f32 %v1831, %v2055
        %v2088 = vmul.f32 %v1832, %v2056
        %v2089 = vmul.f32 %v1833, %v2057
        %v2090 = vmul.f32 %v1834, %v2058
        %v2091 = vmul.f32 %v1835, %v2059
        %v2092 = vmul.f32 %v1836, %v2060
        %v2093 = vmul.f32 %v1837, %v2061
        %v2094 = vmul.f32 %v1838, %v2062
        %v2095 = vmul.f32 %v1839, %v2063
        %v2096 = vmul.f32 %v1840, %v2064
        %v2097 = vmul.f32 %v2065, %v635
        %v2098 = vmul.f32 %v2066, %v639
        %v2099 = vmul.f32 %v2067, %v645
        %v2100 = vmul.f32 %v2068, %v649
        %v2101 = vmul.f32 %v2069, %v655
        %v2102 = vmul.f32 %v2070, %v659
        %v2103 = vmul.f32 %v2071, %v665
        %v2104 = vmul.f32 %v2072, %v669
        %v2105 = vmul.f32 %v2073, %v675
        %v2106 = vmul.f32 %v2074, %v679
        %v2107 = vmul.f32 %v2075, %v685
        %v2108 = vmul.f32 %v2076, %v689
        %v2109 = vmul.f32 %v2077, %v695
        %v2110 = vmul.f32 %v2078, %v699
        %v2111 = vmul.f32 %v2079, %v705
        %v2112 = vmul.f32 %v2080, %v709
        %v2113 = vmul.f32 %v2081, %v715
        %v2114 = vmul.f32 %v2082, %v719
        %v2115 = vmul.f32 %v2083, %v725
        %v2116 = vmul.f32 %v2084, %v729
        %v2117 = vmul.f32 %v2085, %v735
        %v2118 = vmul.f32 %v2086, %v739
        %v2119 = vmul.f32 %v2087, %v745
        %v2120 = vmul.f32 %v2088, %v749
        %v2121 = vmul.f32 %v2089, %v755
        %v2122 = vmul.f32 %v2090, %v759
        %v2123 = vmul.f32 %v2091, %v765
        %v2124 = vmul.f32 %v2092, %v769
        %v2125 = vmul.f32 %v2093, %v775
        %v2126 = vmul.f32 %v2094, %v779
        %v2127 = vmul.f32 %v2095, %v785
        %v2128 = vmul.f32 %v2096, %v789
        %v2129 = vpack.c.bf16 %v2098, %v2097
        %v2130 = vpack.c.bf16 %v2100, %v2099
        %v2131 = vpack.c.bf16 %v2102, %v2101
        %v2132 = vpack.c.bf16 %v2104, %v2103
        %v2133 = vpack.c.bf16 %v2106, %v2105
        %v2134 = vpack.c.bf16 %v2108, %v2107
        %v2135 = vpack.c.bf16 %v2110, %v2109
        %v2136 = vpack.c.bf16 %v2112, %v2111
        %v2137 = vpack.c.bf16 %v2114, %v2113
        %v2138 = vpack.c.bf16 %v2116, %v2115
        %v2139 = vpack.c.bf16 %v2118, %v2117
        %v2140 = vpack.c.bf16 %v2120, %v2119
        %v2141 = vpack.c.bf16 %v2122, %v2121
        %v2142 = vpack.c.bf16 %v2124, %v2123
        %v2143 = vpack.c.bf16 %v2126, %v2125
        %v2144 = vpack.c.bf16 %v2128, %v2127
        %v2145 = vld [vmem:[%s5] sm:$0xff]
        %v2146 = vld [vmem:[%s5 + $0x8] sm:$0xff]
        %v2147 = vld [vmem:[%s5 + $0x10] sm:$0xff]
        %v2148 = vld [vmem:[%s5 + $0x18] sm:$0xff]
        %v2149 = vld [vmem:[%s5 + $0x20] sm:$0xff]
        %v2150 = vld [vmem:[%s5 + $0x28] sm:$0xff]
        %v2151 = vld [vmem:[%s5 + $0x30] sm:$0xff]
        %v2152 = vld [vmem:[%s5 + $0x38] sm:$0xff]
        %v2153 = vld [vmem:[%s5 + $0x40] sm:$0xff]
        %v2154 = vld [vmem:[%s5 + $0x48] sm:$0xff]
        %v2155 = vld [vmem:[%s5 + $0x50] sm:$0xff]
        %v2156 = vld [vmem:[%s5 + $0x58] sm:$0xff]
        %v2157 = vld [vmem:[%s5 + $0x60] sm:$0xff]
        %v2158 = vld [vmem:[%s5 + $0x68] sm:$0xff]
        %v2159 = vld [vmem:[%s5 + $0x70] sm:$0xff]
        %v2160 = vld [vmem:[%s5 + $0x78] sm:$0xff]
        %v2161 = vld [vmem:[%s6] sm:$0x3]
        %v2163 = vlaneseq
        %v2164 = vshrl.u32 %v2163, 7
        %v2165 = vsub.s32 0, %v2164
        %v2166 = vrot.slane %v2161, %v2165
        %v2167 = vlaneseq
        %v2168 = vshrl.u32 %v2167, 7
        %v2169 = vsub.s32 1, %v2168
        %v2170 = vrot.slane %v2161, %v2169
        %v2189 = vunpack.c.l.b16 %v2145
        %v2190 = vunpack.c.h.b16 %v2145
        %v2191 = vunpack.c.l.b16 %v2146
        %v2192 = vunpack.c.h.b16 %v2146
        %v2193 = vunpack.c.l.b16 %v2147
        %v2194 = vunpack.c.h.b16 %v2147
        %v2195 = vunpack.c.l.b16 %v2148
        %v2196 = vunpack.c.h.b16 %v2148
        %v2197 = vunpack.c.l.b16 %v2149
        %v2198 = vunpack.c.h.b16 %v2149
        %v2199 = vunpack.c.l.b16 %v2150
        %v2200 = vunpack.c.h.b16 %v2150
        %v2201 = vunpack.c.l.b16 %v2151
        %v2202 = vunpack.c.h.b16 %v2151
        %v2203 = vunpack.c.l.b16 %v2152
        %v2204 = vunpack.c.h.b16 %v2152
        %v2205 = vunpack.c.l.b16 %v2153
        %v2206 = vunpack.c.h.b16 %v2153
        %v2207 = vunpack.c.l.b16 %v2154
        %v2208 = vunpack.c.h.b16 %v2154
        %v2209 = vunpack.c.l.b16 %v2155
        %v2210 = vunpack.c.h.b16 %v2155
        %v2211 = vunpack.c.l.b16 %v2156
        %v2212 = vunpack.c.h.b16 %v2156
        %v2213 = vunpack.c.l.b16 %v2157
        %v2214 = vunpack.c.h.b16 %v2157
        %v2215 = vunpack.c.l.b16 %v2158
        %v2216 = vunpack.c.h.b16 %v2158
        %v2217 = vunpack.c.l.b16 %v2159
        %v2218 = vunpack.c.h.b16 %v2159
        %v2219 = vunpack.c.l.b16 %v2160
        %v2220 = vunpack.c.h.b16 %v2160
        %v2221 = vpack.c.b16 %v2191, %v2189
        %v2222 = vpack.c.b16 %v2192, %v2190
        %v2223 = vpack.c.b16 %v2195, %v2193
        %v2224 = vpack.c.b16 %v2196, %v2194
        %v2225 = vpack.c.b16 %v2199, %v2197
        %v2226 = vpack.c.b16 %v2200, %v2198
        %v2227 = vpack.c.b16 %v2203, %v2201
        %v2228 = vpack.c.b16 %v2204, %v2202
        %v2229 = vpack.c.b16 %v2207, %v2205
        %v2230 = vpack.c.b16 %v2208, %v2206
        %v2231 = vpack.c.b16 %v2211, %v2209
        %v2232 = vpack.c.b16 %v2212, %v2210
        %v2233 = vpack.c.b16 %v2215, %v2213
        %v2234 = vpack.c.b16 %v2216, %v2214
        %v2235 = vpack.c.b16 %v2219, %v2217
        %v2236 = vpack.c.b16 %v2220, %v2218
        %2253 = vmatprep.subr.bf16.mxu0 %v2222
        %2254 = vmatpush1.bf16.msra.mxu0 %v2221
        %2255 = vmatprep.subr.bf16.mxu0 %v2224
        %2256 = vmatpush1.bf16.msra.mxu0 %v2223
        %2257 = vmatprep.subr.bf16.mxu0 %v2226
        %2258 = vmatpush1.bf16.msra.mxu0 %v2225
        %2259 = vmatprep.subr.bf16.mxu0 %v2228
        %2260 = vmatpush1.bf16.msra.mxu0 %v2227
        %2261 = vmatprep.subr.bf16.mxu0 %v2230
        %2262 = vmatpush1.bf16.msra.mxu0 %v2229
        %2263 = vmatprep.subr.bf16.mxu0 %v2232
        %2264 = vmatpush1.bf16.msra.mxu0 %v2231
        %2265 = vmatprep.subr.bf16.mxu0 %v2234
        %2266 = vmatpush1.bf16.msra.mxu0 %v2233
        %2267 = vmatprep.subr.bf16.mxu0 %v2236
        %2268 = vmatpush1.bf16.msra.mxu0 %v2235
        %2269 = vmatprep.subr.bf16.mxu0 0
        %2270 = vmatpush1.bf16.msra.mxu0 0
        %2271 = vmatprep.subr.bf16.mxu0 0
        %2272 = vmatpush1.bf16.msra.mxu0 0
        %2273 = vmatprep.subr.bf16.mxu0 0
        %2274 = vmatpush1.bf16.msra.mxu0 0
        %2275 = vmatprep.subr.bf16.mxu0 0
        %2276 = vmatpush1.bf16.msra.mxu0 0
        %2277 = vmatprep.subr.bf16.mxu0 0
        %2278 = vmatpush1.bf16.msra.mxu0 0
        %2279 = vmatprep.subr.bf16.mxu0 0
        %2280 = vmatpush1.bf16.msra.mxu0 0
        %2281 = vmatprep.subr.bf16.mxu0 0
        %2282 = vmatpush1.bf16.msra.mxu0 0
        %2283 = vmatprep.subr.bf16.mxu0 0
        %2284 = vmatpush1.bf16.msra.mxu0 0
        %2285 = vmatprep.mubr.bf16.mxu0 0
        %2286 = vmatmul.mubr.bf16.gmra.mrb[0].mxu0 %v2129
        %v2287 = vpop.f32.mrb[0].mxu0
        %v2288 = vadd.f32 %v2166, %v2287
        %v2289 = vpop.f32.mrb[0].mxu0
        %v2290 = vadd.f32 %v2170, %v2289
        %v2291 = vpop.f32.mrb[0].mxu0
        %v2292 = vadd.f32 %v2166, %v2291
        %v2293 = vpop.f32.mrb[0].mxu0
        %v2294 = vadd.f32 %v2170, %v2293
        %2295 = vmatprep.mubr.bf16.mxu0 0
        %2296 = vmatmul.mubr.bf16.gmra.mrb[0].mxu0 %v2130
        %v2297 = vpop.f32.mrb[0].mxu0
        %v2298 = vadd.f32 %v2166, %v2297
        %v2299 = vpop.f32.mrb[0].mxu0
        %v2300 = vadd.f32 %v2170, %v2299
        %v2301 = vpop.f32.mrb[0].mxu0
        %v2302 = vadd.f32 %v2166, %v2301
        %v2303 = vpop.f32.mrb[0].mxu0
        %v2304 = vadd.f32 %v2170, %v2303
        %2305 = vmatprep.mubr.bf16.mxu0 0
        %2306 = vmatmul.mubr.bf16.gmra.mrb[0].mxu0 %v2131
        %v2307 = vpop.f32.mrb[0].mxu0
        %v2308 = vadd.f32 %v2166, %v2307
        %v2309 = vpop.f32.mrb[0].mxu0
        %v2310 = vadd.f32 %v2170, %v2309
        %v2311 = vpop.f32.mrb[0].mxu0
        %v2312 = vadd.f32 %v2166, %v2311
        %v2313 = vpop.f32.mrb[0].mxu0
        %v2314 = vadd.f32 %v2170, %v2313
        %2315 = vmatprep.mubr.bf16.mxu0 0
        %2316 = vmatmul.mubr.bf16.gmra.mrb[0].mxu0 %v2132
        %v2317 = vpop.f32.mrb[0].mxu0
        %v2318 = vadd.f32 %v2166, %v2317
        %v2319 = vpop.f32.mrb[0].mxu0
        %v2320 = vadd.f32 %v2170, %v2319
        %v2321 = vpop.f32.mrb[0].mxu0
        %v2322 = vadd.f32 %v2166, %v2321
        %v2323 = vpop.f32.mrb[0].mxu0
        %v2324 = vadd.f32 %v2170, %v2323
        %2325 = vmatprep.mubr.bf16.mxu0 0
        %2326 = vmatmul.mubr.bf16.gmra.mrb[0].mxu0 %v2133
        %v2327 = vpop.f32.mrb[0].mxu0
        %v2328 = vadd.f32 %v2166, %v2327
        %v2329 = vpop.f32.mrb[0].mxu0
        %v2330 = vadd.f32 %v2170, %v2329
        %v2331 = vpop.f32.mrb[0].mxu0
        %v2332 = vadd.f32 %v2166, %v2331
        %v2333 = vpop.f32.mrb[0].mxu0
        %v2334 = vadd.f32 %v2170, %v2333
        %2335 = vmatprep.mubr.bf16.mxu0 0
        %2336 = vmatmul.mubr.bf16.gmra.mrb[0].mxu0 %v2134
        %v2337 = vpop.f32.mrb[0].mxu0
        %v2338 = vadd.f32 %v2166, %v2337
        %v2339 = vpop.f32.mrb[0].mxu0
        %v2340 = vadd.f32 %v2170, %v2339
        %v2341 = vpop.f32.mrb[0].mxu0
        %v2342 = vadd.f32 %v2166, %v2341
        %v2343 = vpop.f32.mrb[0].mxu0
        %v2344 = vadd.f32 %v2170, %v2343
        %2345 = vmatprep.mubr.bf16.mxu0 0
        %2346 = vmatmul.mubr.bf16.gmra.mrb[0].mxu0 %v2135
        %v2347 = vpop.f32.mrb[0].mxu0
        %v2348 = vadd.f32 %v2166, %v2347
        %v2349 = vpop.f32.mrb[0].mxu0
        %v2350 = vadd.f32 %v2170, %v2349
        %v2351 = vpop.f32.mrb[0].mxu0
        %v2352 = vadd.f32 %v2166, %v2351
        %v2353 = vpop.f32.mrb[0].mxu0
        %v2354 = vadd.f32 %v2170, %v2353
        %2355 = vmatprep.mubr.bf16.mxu0 0
        %2356 = vmatmul.mubr.bf16.gmra.mrb[0].mxu0 %v2136
        %v2357 = vpop.f32.mrb[0].mxu0
        %v2358 = vadd.f32 %v2166, %v2357
        %v2359 = vpop.f32.mrb[0].mxu0
        %v2360 = vadd.f32 %v2170, %v2359
        %v2361 = vpop.f32.mrb[0].mxu0
        %v2362 = vadd.f32 %v2166, %v2361
        %v2363 = vpop.f32.mrb[0].mxu0
        %v2364 = vadd.f32 %v2170, %v2363
        %2365 = vmatprep.mubr.bf16.mxu0 0
        %2366 = vmatmul.mubr.bf16.gmra.mrb[0].mxu0 %v2137
        %v2367 = vpop.f32.mrb[0].mxu0
        %v2368 = vadd.f32 %v2166, %v2367
        %v2369 = vpop.f32.mrb[0].mxu0
        %v2370 = vadd.f32 %v2170, %v2369
        %v2371 = vpop.f32.mrb[0].mxu0
        %v2372 = vadd.f32 %v2166, %v2371
        %v2373 = vpop.f32.mrb[0].mxu0
        %v2374 = vadd.f32 %v2170, %v2373
        %2375 = vmatprep.mubr.bf16.mxu0 0
        %2376 = vmatmul.mubr.bf16.gmra.mrb[0].mxu0 %v2138
        %v2377 = vpop.f32.mrb[0].mxu0
        %v2378 = vadd.f32 %v2166, %v2377
        %v2379 = vpop.f32.mrb[0].mxu0
        %v2380 = vadd.f32 %v2170, %v2379
        %v2381 = vpop.f32.mrb[0].mxu0
        %v2382 = vadd.f32 %v2166, %v2381
        %v2383 = vpop.f32.mrb[0].mxu0
        %v2384 = vadd.f32 %v2170, %v2383
        %2385 = vmatprep.mubr.bf16.mxu0 0
        %2386 = vmatmul.mubr.bf16.gmra.mrb[0].mxu0 %v2139
        %v2387 = vpop.f32.mrb[0].mxu0
        %v2388 = vadd.f32 %v2166, %v2387
        %v2389 = vpop.f32.mrb[0].mxu0
        %v2390 = vadd.f32 %v2170, %v2389
        %v2391 = vpop.f32.mrb[0].mxu0
        %v2392 = vadd.f32 %v2166, %v2391
        %v2393 = vpop.f32.mrb[0].mxu0
        %v2394 = vadd.f32 %v2170, %v2393
        %2395 = vmatprep.mubr.bf16.mxu0 0
        %2396 = vmatmul.mubr.bf16.gmra.mrb[0].mxu0 %v2140
        %v2397 = vpop.f32.mrb[0].mxu0
        %v2398 = vadd.f32 %v2166, %v2397
        %v2399 = vpop.f32.mrb[0].mxu0
        %v2400 = vadd.f32 %v2170, %v2399
        %v2401 = vpop.f32.mrb[0].mxu0
        %v2402 = vadd.f32 %v2166, %v2401
        %v2403 = vpop.f32.mrb[0].mxu0
        %v2404 = vadd.f32 %v2170, %v2403
        %2405 = vmatprep.mubr.bf16.mxu0 0
        %2406 = vmatmul.mubr.bf16.gmra.mrb[0].mxu0 %v2141
        %v2407 = vpop.f32.mrb[0].mxu0
        %v2408 = vadd.f32 %v2166, %v2407
        %v2409 = vpop.f32.mrb[0].mxu0
        %v2410 = vadd.f32 %v2170, %v2409
        %v2411 = vpop.f32.mrb[0].mxu0
        %v2412 = vadd.f32 %v2166, %v2411
        %v2413 = vpop.f32.mrb[0].mxu0
        %v2414 = vadd.f32 %v2170, %v2413
        %2415 = vmatprep.mubr.bf16.mxu0 0
        %2416 = vmatmul.mubr.bf16.gmra.mrb[0].mxu0 %v2142
        %v2417 = vpop.f32.mrb[0].mxu0
        %v2418 = vadd.f32 %v2166, %v2417
        %v2419 = vpop.f32.mrb[0].mxu0
        %v2420 = vadd.f32 %v2170, %v2419
        %v2421 = vpop.f32.mrb[0].mxu0
        %v2422 = vadd.f32 %v2166, %v2421
        %v2423 = vpop.f32.mrb[0].mxu0
        %v2424 = vadd.f32 %v2170, %v2423
        %2425 = vmatprep.mubr.bf16.mxu0 0
        %2426 = vmatmul.mubr.bf16.gmra.mrb[0].mxu0 %v2143
        %v2427 = vpop.f32.mrb[0].mxu0
        %v2428 = vadd.f32 %v2166, %v2427
        %v2429 = vpop.f32.mrb[0].mxu0
        %v2430 = vadd.f32 %v2170, %v2429
        %v2431 = vpop.f32.mrb[0].mxu0
        %v2432 = vadd.f32 %v2166, %v2431
        %v2433 = vpop.f32.mrb[0].mxu0
        %v2434 = vadd.f32 %v2170, %v2433
        %2435 = vmatprep.mubr.bf16.mxu0 0
        %2436 = vmatmul.mubr.bf16.gmra.mrb[0].mxu0 %v2144
        %v2437 = vpop.f32.mrb[0].mxu0
        %v2438 = vadd.f32 %v2166, %v2437
        %v2439 = vpop.f32.mrb[0].mxu0
        %v2440 = vadd.f32 %v2170, %v2439
        %v2441 = vpop.f32.mrb[0].mxu0
        %v2442 = vadd.f32 %v2166, %v2441
        %v2443 = vpop.f32.mrb[0].mxu0
        %v2444 = vadd.f32 %v2170, %v2443
        %2445 = vdwg.mxu0
        %2446 = vst [vmem:[%s296] sm:$0xff] %v2288
        %2447 = vst [vmem:[%s296 + $0x8] sm:$0xff] %v2290
        %2448 = vst [vmem:[%s296 + $0x10] sm:$0xff] %v2292
        %2449 = vst [vmem:[%s296 + $0x18] sm:$0xff] %v2294
        %2450 = vst [vmem:[%s296 + $0x20] sm:$0xff] %v2298
        %2451 = vst [vmem:[%s296 + $0x28] sm:$0xff] %v2300
        %2452 = vst [vmem:[%s296 + $0x30] sm:$0xff] %v2302
        %2453 = vst [vmem:[%s296 + $0x38] sm:$0xff] %v2304
        %2454 = vst [vmem:[%s296 + $0x40] sm:$0xff] %v2308
        %2455 = vst [vmem:[%s296 + $0x48] sm:$0xff] %v2310
        %2456 = vst [vmem:[%s296 + $0x50] sm:$0xff] %v2312
        %2457 = vst [vmem:[%s296 + $0x58] sm:$0xff] %v2314
        %2458 = vst [vmem:[%s296 + $0x60] sm:$0xff] %v2318
        %2459 = vst [vmem:[%s296 + $0x68] sm:$0xff] %v2320
        %2460 = vst [vmem:[%s296 + $0x70] sm:$0xff] %v2322
        %2461 = vst [vmem:[%s296 + $0x78] sm:$0xff] %v2324
        %2462 = vst [vmem:[%s296 + $0x80] sm:$0xff] %v2328
        %2463 = vst [vmem:[%s296 + $0x88] sm:$0xff] %v2330
        %2464 = vst [vmem:[%s296 + $0x90] sm:$0xff] %v2332
        %2465 = vst [vmem:[%s296 + $0x98] sm:$0xff] %v2334
        %2466 = vst [vmem:[%s296 + $0xa0] sm:$0xff] %v2338
        %2467 = vst [vmem:[%s296 + $0xa8] sm:$0xff] %v2340
        %2468 = vst [vmem:[%s296 + $0xb0] sm:$0xff] %v2342
        %2469 = vst [vmem:[%s296 + $0xb8] sm:$0xff] %v2344
        %2470 = vst [vmem:[%s296 + $0xc0] sm:$0xff] %v2348
        %2471 = vst [vmem:[%s296 + $0xc8] sm:$0xff] %v2350
        %2472 = vst [vmem:[%s296 + $0xd0] sm:$0xff] %v2352
        %2473 = vst [vmem:[%s296 + $0xd8] sm:$0xff] %v2354
        %2474 = vst [vmem:[%s296 + $0xe0] sm:$0xff] %v2358
        %2475 = vst [vmem:[%s296 + $0xe8] sm:$0xff] %v2360
        %2476 = vst [vmem:[%s296 + $0xf0] sm:$0xff] %v2362
        %2477 = vst [vmem:[%s296 + $0xf8] sm:$0xff] %v2364
        %2478 = vst [vmem:[%s296 + $0x100] sm:$0xff] %v2368
        %2479 = vst [vmem:[%s296 + $0x108] sm:$0xff] %v2370
        %2480 = vst [vmem:[%s296 + $0x110] sm:$0xff] %v2372
        %2481 = vst [vmem:[%s296 + $0x118] sm:$0xff] %v2374
        %2482 = vst [vmem:[%s296 + $0x120] sm:$0xff] %v2378
        %2483 = vst [vmem:[%s296 + $0x128] sm:$0xff] %v2380
        %2484 = vst [vmem:[%s296 + $0x130] sm:$0xff] %v2382
        %2485 = vst [vmem:[%s296 + $0x138] sm:$0xff] %v2384
        %2486 = vst [vmem:[%s296 + $0x140] sm:$0xff] %v2388
        %2487 = vst [vmem:[%s296 + $0x148] sm:$0xff] %v2390
        %2488 = vst [vmem:[%s296 + $0x150] sm:$0xff] %v2392
        %2489 = vst [vmem:[%s296 + $0x158] sm:$0xff] %v2394
        %2490 = vst [vmem:[%s296 + $0x160] sm:$0xff] %v2398
        %2491 = vst [vmem:[%s296 + $0x168] sm:$0xff] %v2400
        %2492 = vst [vmem:[%s296 + $0x170] sm:$0xff] %v2402
        %2493 = vst [vmem:[%s296 + $0x178] sm:$0xff] %v2404
        %2494 = vst [vmem:[%s296 + $0x180] sm:$0xff] %v2408
        %2495 = vst [vmem:[%s296 + $0x188] sm:$0xff] %v2410
        %2496 = vst [vmem:[%s296 + $0x190] sm:$0xff] %v2412
        %2497 = vst [vmem:[%s296 + $0x198] sm:$0xff] %v2414
        %2498 = vst [vmem:[%s296 + $0x1a0] sm:$0xff] %v2418
        %2499 = vst [vmem:[%s296 + $0x1a8] sm:$0xff] %v2420
        %2500 = vst [vmem:[%s296 + $0x1b0] sm:$0xff] %v2422
        %2501 = vst [vmem:[%s296 + $0x1b8] sm:$0xff] %v2424
        %2502 = vst [vmem:[%s296 + $0x1c0] sm:$0xff] %v2428
        %2503 = vst [vmem:[%s296 + $0x1c8] sm:$0xff] %v2430
        %2504 = vst [vmem:[%s296 + $0x1d0] sm:$0xff] %v2432
        %2505 = vst [vmem:[%s296 + $0x1d8] sm:$0xff] %v2434
        %2506 = vst [vmem:[%s296 + $0x1e0] sm:$0xff] %v2438
        %2507 = vst [vmem:[%s296 + $0x1e8] sm:$0xff] %v2440
        %2508 = vst [vmem:[%s296 + $0x1f0] sm:$0xff] %v2442
        %2509 = vst [vmem:[%s296 + $0x1f8] sm:$0xff] %v2444
        %s2510 = sand.u32 %s184, 1
        %s2511 = scalar_lea.sflag [#allocation5], %s2510
        %s2512 = sand.u32 %s184, 1
        %s2513 = smul.addr %s2512, 512
        %s2514 = scalar_lea.vmem [#allocation6], %s2513
        // Predicated region
        $region53: #{conv_glu.1} parent=47 // pred_check
          %p2515 = pneg %p194
        $region54: #{conv_glu.1} parent=47 // pred_check_branch
          %2517 = sbr.rel (%p2515) target = $region56
        $region55: #{conv_glu.1} parent=47 // pred_region
          %s2519 = ssub.s32 8192, 8192
          %2520 = vsyncadd %s2511, %s2519
          %s2521 = smul.addr %s24, 64
          %s2522 = smul.addr %s2521, 128
          %s2523 = scalar_lea.hbm %s7, %s2522
          %s2524 = sshll.u32 %s2514, 4
          %s2525 = int_to_ptr.vmem [resolvable:$true] %s2524
          %2530 = dma.vmem_to_hbm [thread:$0]  %s2525, 8192, %s2523, %s2511, 256, 256, 16
        $region56: #{conv_glu.1} parent=47 // pred_fallthru
          _
      $region48: #{conv_glu.1} parent=5 // pred_fallthru
        _
      %p2531 = scmp.le.s32.totalorder 2, %s19
      // Predicated region
      $region57: #{conv_glu.1} parent=5 // pred_check
        %p2532 = pneg %p2531
      $region58: #{conv_glu.1} parent=5 // pred_check_branch
        %2534 = sbr.rel (%p2532) target = $region60
      $region59: #{conv_glu.1} parent=5 // pred_region
        %s2535 = ssub.s32 %s19, 2
        // Predicated region
        $region61: #{conv_glu.1} parent=59 // pred_check
          %p2536 = pneg %p200
        $region62: #{conv_glu.1} parent=59 // pred_check_branch
          %2538 = sbr.rel (%p2536) target = $region64
        $region63: #{conv_glu.1} parent=59 // pred_region
          %s2539 = sand.u32 %s185, 1
          %s2540 = scalar_lea.sflag [#allocation5], %s2539
          %s2541 = sand.u32 %s185, 1
          %s2542 = smul.addr %s2541, 512
          %s2543 = scalar_lea.vmem [#allocation6], %s2542
          %2544 = dma.done %s2540, 8192
        $region64: #{conv_glu.1} parent=59 // pred_fallthru
          _
      $region60: #{conv_glu.1} parent=5 // pred_fallthru
        _
    $region6: #{conv_glu.1} parent=1 // loop_footer
      %s23 = sadd.s32 1, %s19
    $region7: #{conv_glu.1} parent=1 // loop_footer_branch
      %18 = sbr.rel target = $region3
    $region8: #{conv_glu.1} parent=1 // loop_exit
      _
    %2545 = vsyncpa [#allocation4], 1
    %s2546 = scalar_lea.sflag [#allocation4], 1
    %2547 = vsyncpa %s2546, 1
    %2548 = vsyncpa [#allocation5], 1
    %s2549 = scalar_lea.sflag [#allocation5], 1
    %2550 = vsyncpa %s2549, 1

</llo_original>
